<compile_context>
chip_gen: v5e
topology: v5e:2x2
jax: 0.10.0
libtpu: 0.0.40
codegen_flags: <defaults>
</compile_context>

<pallas_src>
import functools

import numpy as np
import jax
import jax.numpy as jnp
from jax import lax
from jax.experimental import pallas as pl
from jax.experimental.pallas import tpu as pltpu


def _round_up(x, m):
    return ((x + m - 1) // m) * m


def _pick_tile(d, cap):
    """Largest legal tile <= cap that divides d (or the full dim)."""
    if d <= cap:
        return d
    if d % 128 == 0:
        for c in range(cap - cap % 128, 127, -128):
            if d % c == 0:
                return c
    return d  # full dimension is always a legal block


def _vmem_limit_bytes():
    # Generation-aware scoped-VMEM limit with headroom below physical VMEM
    # (v7x: 64 MiB/TC, v5e/v6e: 128 MiB).  Conservative fallback if the query
    # is unavailable.
    try:
        cap = int(pltpu.get_tpu_info().vmem_capacity_bytes)
    except Exception:
        cap = 64 * 1024 * 1024
    return max(32 * 1024 * 1024, min(cap - (16 << 20), 64 << 20))


_VMEM_LIMIT = _vmem_limit_bytes()


# ----------------------------------------------------------------------------
# Pallas kernel 1: tiled GEMM,  out = relu_opt(x @ w + bias [+ res])
# bf16 operands, f32 accumulation on the MXU, bf16 store.
# ----------------------------------------------------------------------------
def _mm_kernel(*refs, relu, multi_k, has_res):
    if has_res:
        x_ref, w_ref, b_ref, r_ref = refs[:4]
        rest = refs[4:]
    else:
        x_ref, w_ref, b_ref = refs[:3]
        r_ref = None
        rest = refs[3:]

    if not multi_k:
        # single K step: no scratch accumulator, no zero-init, direct epilogue
        (o_ref,) = rest
        y = jnp.dot(x_ref[...], w_ref[...],
                    preferred_element_type=jnp.float32) + b_ref[...]
        if r_ref is not None:
            y = y + r_ref[...].astype(jnp.float32)
        if relu:
            y = jnp.maximum(y, 0.0)
        o_ref[...] = y.astype(o_ref.dtype)
        return

    o_ref, acc_ref = rest
    k = pl.program_id(2)
    part = jnp.dot(x_ref[...], w_ref[...], preferred_element_type=jnp.float32)

    @pl.when(k == 0)
    def _():
        acc_ref[...] = part            # direct write: no zero-init store

    @pl.when(k > 0)
    def _():
        acc_ref[...] += part

    @pl.when(k == pl.num_programs(2) - 1)
    def _():
        y = acc_ref[...] + b_ref[...]
        if r_ref is not None:
            y = y + r_ref[...].astype(jnp.float32)
        if relu:
            y = jnp.maximum(y, 0.0)
        o_ref[...] = y.astype(o_ref.dtype)


@functools.partial(jax.jit, static_argnames=("relu",))
def fused_matmul(x, w, bias, relu, res=None):
    """x:(M,K), w:(K,N) bf16 (BN folded), bias:(1,N) f32, res:(M,N)|None."""
    M, K = x.shape
    N = w.shape[1]
    x = x.astype(jnp.bfloat16)
    has_res = res is not None
    if has_res:
        res = res.astype(jnp.bfloat16)

    tm = min(512, _round_up(M, 16))
    Mp = _round_up(M, tm)
    if Mp != M:
        x = jnp.pad(x, ((0, Mp - M), (0, 0)))
        if has_res:
            res = jnp.pad(res, ((0, Mp - M), (0, 0)))
    tk = _pick_tile(K, 2048)
    tn = _pick_tile(N, 512)
    nk = K // tk
    multi_k = nk > 1

    kernel = functools.partial(_mm_kernel, relu=relu, multi_k=multi_k,
                               has_res=has_res)
    if not multi_k:
        grid = (Mp // tm, N // tn)
        in_specs = [pl.BlockSpec((tm, K), lambda i, j: (i, 0)),
                    pl.BlockSpec((K, tn), lambda i, j: (0, j)),
                    pl.BlockSpec((1, tn), lambda i, j: (0, j))]
        if has_res:
            in_specs.append(pl.BlockSpec((tm, tn), lambda i, j: (i, j)))
        out_specs = pl.BlockSpec((tm, tn), lambda i, j: (i, j))
        scratch = []
        dims = ("parallel", "parallel")
    else:
        grid = (Mp // tm, N // tn, nk)
        in_specs = [pl.BlockSpec((tm, tk), lambda i, j, k: (i, k)),
                    pl.BlockSpec((tk, tn), lambda i, j, k: (k, j)),
                    pl.BlockSpec((1, tn), lambda i, j, k: (0, j))]
        if has_res:
            in_specs.append(pl.BlockSpec((tm, tn), lambda i, j, k: (i, j)))
        out_specs = pl.BlockSpec((tm, tn), lambda i, j, k: (i, j))
        scratch = [pltpu.VMEM((tm, tn), jnp.float32)]
        dims = ("parallel", "parallel", "arbitrary")

    args = (x, w, bias) + ((res,) if has_res else ())
    out = pl.pallas_call(
        kernel,
        out_shape=jax.ShapeDtypeStruct((Mp, N), jnp.bfloat16),
        grid_spec=pltpu.PrefetchScalarGridSpec(
            num_scalar_prefetch=0, grid=grid,
            in_specs=in_specs, out_specs=out_specs, scratch_shapes=scratch),
        compiler_params=pltpu.CompilerParams(
            dimension_semantics=dims, vmem_limit_bytes=_VMEM_LIMIT),
    )(*args)
    return out[:M] if Mp != M else out


# ----------------------------------------------------------------------------
# Pallas kernel 2: implicit-GEMM stride-1 conv (tap loop inside the kernel).
# The zero-padded image is flattened to (rows, C); computing the output at the
# padded width wp ("overwide") makes every tap a contiguous row window of that
# flat matrix.  The output is tiled into row bands (grid axis) accumulated in a
# per-band f32 VMEM scratch, so there is no vreg spill and the pipeline / both
# v7x TensorCores have work.  Junk columns (ow >= wo) are sliced off outside.
# ----------------------------------------------------------------------------
def _conv_tap_kernel(x_ref, w_ref, b_ref, o_ref, acc_ref, *, taps, c, bm, relu):
    row0 = pl.multiple_of(pl.program_id(1) * bm, bm)
    for t, start in enumerate(taps):
        patch = x_ref[0, pl.ds(row0 + start, bm), :]       # (bm, C) bf16
        wt = w_ref[t * c:(t + 1) * c, :]                    # (C, tn) bf16
        part = jnp.dot(patch, wt, preferred_element_type=jnp.float32)
        if t == 0:
            acc_ref[...] = part                             # no zero-init pass
        else:
            acc_ref[...] += part
    y = acc_ref[...] + b_ref[...]
    if relu:
        y = jnp.maximum(y, 0.0)
    o_ref[0, :, :] = y.astype(o_ref.dtype)


def _pick_bm(ho, wp, tn):
    """Rows per output band: a multiple of wp (whole image rows), divisible by
    8 (lane/sublane-dense store), sized so the f32 accumulator stays small."""
    mw = ho * wp
    cap = max(8, min(1024, (128 * 1024) // (4 * max(tn, 1))))
    best = None
    for r in range(1, ho):
        if ho % r:
            continue
        bm = r * wp
        if bm % 8 == 0 and bm <= cap:
            best = bm
    return best if best is not None else mw


def _tap_geometry(h, w_, c, kh, kw, ph, pw, dil, n_out):
    hp, wp = h + 2 * ph, w_ + 2 * pw
    ho, wo = hp - dil * (kh - 1), wp - dil * (kw - 1)
    extra = dil * (kw - 1)
    er = -(-extra // wp) if extra else 0      # extra zero rows at the tail
    lp = (hp + er) * wp
    mw = ho * wp
    tn = _pick_tile(n_out, 512)
    bm = _pick_bm(ho, wp, tn)
    taps = tuple(i * dil * wp + j * dil for i in range(kh) for j in range(kw))
    return dict(wp=wp, ho=ho, wo=wo, er=er, lp=lp, mw=mw, tn=tn, bm=bm,
                taps=taps)


def _use_implicit(xshape, kh, kw, ph, pw, dil, n_out):
    _, h, w_, c = xshape
    hp, wp = h + 2 * ph, w_ + 2 * pw
    ho, wo = hp - dil * (kh - 1), wp - dil * (kw - 1)
    if ho <= 0 or wo <= 0:
        return False
    if (wp - wo) / wp > 0.25:        # too much wasted overwide MXU work
        return False
    g = _tap_geometry(h, w_, c, kh, kw, ph, pw, dil, n_out)
    k = kh * kw * c
    vmem = (2 * 2 * g["lp"] * c              # bf16 image block (dbl buffered)
            + 2 * 2 * k * g["tn"]            # bf16 weight block
            + 2 * 2 * g["bm"] * g["tn"]      # bf16 output band
            + 4 * g["bm"] * g["tn"])         # f32 accumulator scratch
    return vmem <= int(_VMEM_LIMIT * 0.75)


@functools.partial(jax.jit,
                   static_argnames=("kh", "kw", "ph", "pw", "dil", "relu"))
def conv_taps(x, w_mm, bias, kh, kw, ph, pw, dil, relu):
    nb, h, w_, c = x.shape
    n_out = w_mm.shape[1]
    g = _tap_geometry(h, w_, c, kh, kw, ph, pw, dil, n_out)
    wp, ho, wo = g["wp"], g["ho"], g["wo"]
    er, lp, mw = g["er"], g["lp"], g["mw"]
    tn, bm, taps = g["tn"], g["bm"], g["taps"]

    xf = jnp.pad(x.astype(jnp.bfloat16),
                 ((0, 0), (ph, ph + er), (pw, pw), (0, 0))).reshape(nb, lp, c)

    out = pl.pallas_call(
        functools.partial(_conv_tap_kernel, taps=taps, c=c, bm=bm, relu=relu),
        out_shape=jax.ShapeDtypeStruct((nb, mw, n_out), jnp.bfloat16),
        grid_spec=pltpu.PrefetchScalarGridSpec(
            num_scalar_prefetch=0,
            grid=(nb, mw // bm, n_out // tn),
            in_specs=[
                pl.BlockSpec((1, lp, c), lambda b, m, j: (b, 0, 0)),
                pl.BlockSpec((kh * kw * c, tn), lambda b, m, j: (0, j)),
                pl.BlockSpec((1, tn), lambda b, m, j: (0, j)),
            ],
            out_specs=pl.BlockSpec((1, bm, tn), lambda b, m, j: (b, m, j)),
            scratch_shapes=[pltpu.VMEM((bm, tn), jnp.float32)],
        ),
        compiler_params=pltpu.CompilerParams(
            dimension_semantics=("parallel", "parallel", "parallel"),
            vmem_limit_bytes=_VMEM_LIMIT),
    )(xf, w_mm, bias)
    return out.reshape(nb, ho, wp, n_out)[:, :, :wo, :]


# ----------------------------------------------------------------------------
# Conv glue
# ----------------------------------------------------------------------------
def _im2col(x, kh, kw, stride, ph, pw, dil):
    # only used for strided KxK convs (7x7/s2 stem, 3x3/s2 bottlenecks) and
    # heavily-dilated convs at tiny spatial maps (overwide waste > 25%).
    n, h, w, c = x.shape
    xp = jnp.pad(x, ((0, 0), (ph, ph), (pw, pw), (0, 0)))
    hp, wp = h + 2 * ph, w + 2 * pw
    ho = (hp - (dil * (kh - 1) + 1)) // stride + 1
    wo = (wp - (dil * (kw - 1) + 1)) // stride + 1
    cols = []
    for i in range(kh):
        for j in range(kw):
            sl = xp[:, i * dil: i * dil + (ho - 1) * stride + 1: stride,
                       j * dil: j * dil + (wo - 1) * stride + 1: stride, :]
            cols.append(sl)
    return jnp.concatenate(cols, axis=-1), ho, wo


def conv_bn(x, p, stride=1, padding=0, dilation=1, relu=True, res=None):
    kh, kw = p["kh"], p["kw"]
    if isinstance(padding, (tuple, list)):
        ph, pw = padding
    else:
        ph = pw = padding
    n = x.shape[0]

    if kh == 1 and kw == 1:
        if stride > 1:
            x = x[:, ::stride, ::stride, :]   # 1x1 strided conv == subsample
        _, h, w_, c = x.shape
        r2 = None if res is None else res.reshape(n * h * w_, -1)
        y = fused_matmul(x.reshape(n * h * w_, c), p["w_mm"], p["b"],
                         relu=relu, res=r2)
        return y.reshape(n, h, w_, -1)

    if stride == 1 and _use_implicit(x.shape, kh, kw, ph, pw, dilation,
                                     p["w_mm"].shape[1]):
        return conv_taps(x, p["w_mm"], p["b"], kh=kh, kw=kw, ph=ph, pw=pw,
                         dil=dilation, relu=relu)

    # TODO(synk): strided-tap Pallas variant for the 7x7/s2 stem and 3x3/s2
    # bottleneck convs; plain-JAX im2col + Pallas GEMM is used here instead.
    patches, ho, wo = _im2col(x.astype(jnp.bfloat16), kh, kw, stride, ph, pw,
                              dilation)
    y = fused_matmul(patches.reshape(n * ho * wo, -1), p["w_mm"], p["b"],
                     relu=relu)
    return y.reshape(n, ho, wo, -1)


def conv_transpose_2x2(x, p):
    """nn.ConvTranspose2d(kernel_size=2, stride=2) as a GEMM to 4*Cout cols."""
    n, h, w_, cin = x.shape
    cout = p["cout"]
    y = fused_matmul(x.reshape(n * h * w_, cin), p["w_mm"], p["b"], relu=False)
    y = y.reshape(n, h, w_, 2, 2, cout)
    return jnp.transpose(y, (0, 1, 3, 2, 4, 5)).reshape(n, 2 * h, 2 * w_, cout)


def conv1x1_out(x, p):
    # cout==1 conv: keep it off the MXU; VPU channel reduction in f32.
    y = jnp.einsum("nhwc,ck->nhwk", x.astype(jnp.float32), p["w2d"])
    return y + p["b"]


# ----------------------------------------------------------------------------
# Plain-JAX glue: bilinear upsample (align_corners=True) via small dense
# interpolation matrices (MXU matmul, no TPU gathers), maxpool.
# ----------------------------------------------------------------------------
@functools.lru_cache(maxsize=None)
def _interp_mat(n_in, n_out):
    m = np.zeros((n_out, n_in), np.float32)
    if n_in == 1 or n_out == 1:
        m[:, 0] = 1.0
        return m
    r = np.arange(n_out, dtype=np.float64) * ((n_in - 1) / (n_out - 1))
    i0 = np.clip(np.floor(r).astype(np.int64), 0, n_in - 1)
    i1 = np.clip(i0 + 1, 0, n_in - 1)
    w = (r - i0).astype(np.float32)
    np.add.at(m, (np.arange(n_out), i0), 1.0 - w)
    np.add.at(m, (np.arange(n_out), i1), w)
    return m


def upsample_bilinear(x, scale):
    n, h, w, c = x.shape
    mh = jnp.asarray(_interp_mat(h, h * scale))
    mw = jnp.asarray(_interp_mat(w, w * scale))
    y = jnp.einsum("oh,nhwc->nowc", mh, x.astype(jnp.float32))
    y = jnp.einsum("pw,nowc->nopc", mw, y)
    return y.astype(x.dtype)


def maxpool_3x3_s2_p1(x):
    return lax.reduce_window(x, jnp.array(-jnp.inf, x.dtype), lax.max,
                             (1, 3, 3, 1), (1, 2, 2, 1),
                             ((0, 0), (1, 1), (1, 1), (0, 0)))


# ----------------------------------------------------------------------------
# Deterministic parameter initialization (synthetic; no checkpoint loading)
# ----------------------------------------------------------------------------
_KEY = [jax.random.PRNGKey(0)]


def _next_key():
    _KEY[0], sub = jax.random.split(_KEY[0])
    return sub


def _conv_w(cin, cout, kh, kw):
    fan_in = cin * kh * kw
    std = (2.0 / fan_in) ** 0.5 * 0.5
    return jax.random.normal(_next_key(), (cout, cin, kh, kw), jnp.float32) * std


def _init_cb(cin, cout, kh, kw):
    # Conv2d(bias=False) + BatchNorm2d(eval) folded; BN scale folded into the
    # bf16 GEMM weight at init so the kernel epilogue is just bias (+ReLU).
    w = _conv_w(cin, cout, kh, kw)
    gamma = 1.0 + 0.1 * jax.random.normal(_next_key(), (cout,), jnp.float32)
    beta = 0.1 * jax.random.normal(_next_key(), (cout,), jnp.float32)
    running_mean = jnp.zeros((cout,), jnp.float32)
    running_var = jnp.ones((cout,), jnp.float32)
    scale = gamma / jnp.sqrt(running_var + 1e-5)
    bias = beta - running_mean * scale
    w_hwio = jnp.transpose(w, (2, 3, 1, 0)) * scale        # (kh,kw,cin,cout)
    return {"w_mm": w_hwio.reshape(kh * kw * cin, cout).astype(jnp.bfloat16),
            "b": bias.reshape(1, cout).astype(jnp.float32),
            "kh": kh, "kw": kw}


def _init_conv1x1_bias(cin, cout):
    w = _conv_w(cin, cout, 1, 1)
    b = 0.1 * jax.random.normal(_next_key(), (cout,), jnp.float32)
    return {"w2d": jnp.transpose(w, (2, 3, 1, 0)).reshape(cin, cout), "b": b}


def _init_convT(cin, cout):
    std = (2.0 / (cin * 4)) ** 0.5 * 0.5
    w = jax.random.normal(_next_key(), (cin, cout, 2, 2), jnp.float32) * std
    b = 0.1 * jax.random.normal(_next_key(), (cout,), jnp.float32)
    w_mm = jnp.transpose(w, (0, 2, 3, 1)).reshape(cin, 4 * cout)
    return {"w_mm": w_mm.astype(jnp.bfloat16),
            "b": jnp.tile(b, 4).reshape(1, 4 * cout).astype(jnp.float32),
            "cout": cout}


def _init_rfb(cin, cout):
    b0 = _init_cb(cin, cout, 1, 1)
    b1 = [_init_cb(cin, cout, 1, 1), _init_cb(cout, cout, 1, 3),
          _init_cb(cout, cout, 3, 1), _init_cb(cout, cout, 3, 3)]
    b2 = [_init_cb(cin, cout, 1, 1), _init_cb(cout, cout, 1, 5),
          _init_cb(cout, cout, 5, 1), _init_cb(cout, cout, 3, 3)]
    b3 = [_init_cb(cin, cout, 1, 1), _init_cb(cout, cout, 1, 7),
          _init_cb(cout, cout, 7, 1), _init_cb(cout, cout, 3, 3)]
    conv_res = _init_cb(cin, cout, 1, 1)
    heads = [b0, b1[0], b2[0], b3[0], conv_res]      # five 1x1 convs, same input
    in_fused = {"w_mm": jnp.concatenate([h["w_mm"] for h in heads], axis=1),
                "b": jnp.concatenate([h["b"] for h in heads], axis=1),
                "kh": 1, "kw": 1}
    return {"in_fused": in_fused, "b1": b1[1:], "b2": b2[1:], "b3": b3[1:],
            "conv_cat": _init_cb(4 * cout, cout, 3, 3), "cout": cout}


def _init_agg(c):
    # conv_upsample1 and conv_upsample4 both consume upsample(x1): fuse them
    # into one 3x3 conv with 2C outputs (lane-dense store, 2x MXU column fill).
    cu1 = _init_cb(c, c, 3, 3)
    cu4 = _init_cb(c, c, 3, 3)
    cu14 = {"w_mm": jnp.concatenate([cu1["w_mm"], cu4["w_mm"]], axis=1),
            "b": jnp.concatenate([cu1["b"], cu4["b"]], axis=1),
            "kh": 3, "kw": 3}
    return {
        "cu14": cu14,
        "cu2": _init_cb(c, c, 3, 3), "cu3": _init_cb(c, c, 3, 3),
        "cu5": _init_cb(2 * c, 2 * c, 3, 3),
        "cc2": _init_cb(2 * c, 2 * c, 3, 3),
        "cc3": _init_cb(3 * c, 3 * c, 3, 3),
        "conv4": _init_cb(3 * c, 3 * c, 3, 3),
        "conv5": _init_conv1x1_bias(3 * c, 1),
    }


def init_unet_params(in_channels=3, base_channels=32):
    # TODO(synk): pretrained=True resnet50 weights cannot be loaded in-script;
    # the same architecture is initialized deterministically instead.
    P = {"enc_conv1": _init_cb(in_channels, 64, 7, 7)}

    def make_layer(inplanes, planes, blocks, stride):
        layer = []
        for b in range(blocks):
            p = {"c1": _init_cb(inplanes if b == 0 else planes * 4, planes, 1, 1),
                 "c2": _init_cb(planes, planes, 3, 3),
                 "c3": _init_cb(planes, planes * 4, 1, 1),
                 "stride": stride if b == 0 else 1}
            if b == 0:
                p["down"] = _init_cb(inplanes, planes * 4, 1, 1)
            layer.append(p)
        return layer

    P["layer1"] = make_layer(64, 64, 3, 1)
    P["layer2"] = make_layer(256, 128, 4, 2)
    P["layer3"] = make_layer(512, 256, 6, 2)
    P["layer4"] = make_layer(1024, 512, 3, 2)

    bc = base_channels
    P["rfb1"] = _init_rfb(256, bc)
    P["rfb2"] = _init_rfb(512, bc)
    P["rfb3"] = _init_rfb(1024, bc)
    P["rfb4"] = _init_rfb(2048, bc)
    P["agg"] = _init_agg(bc)
    for name in ("up4", "up3", "up2", "up1"):
        P[name] = _init_convT(bc, bc)
    P["dec_conv4"] = _init_cb(2 * bc, bc, 3, 3)
    P["dec_conv3"] = _init_cb(2 * bc, bc, 3, 3)
    P["dec_conv2"] = _init_cb(2 * bc, bc, 3, 3)
    P["dec_conv1"] = _init_cb(2 * bc, bc, 3, 3)
    P["final_conv"] = _init_conv1x1_bias(bc, 1)
    return P


# ----------------------------------------------------------------------------
# Module forwards
# ----------------------------------------------------------------------------
def bottleneck_forward(x, p):
    out = conv_bn(x, p["c1"], relu=True)
    out = conv_bn(out, p["c2"], stride=p["stride"], padding=1, relu=True)
    identity = (conv_bn(x, p["down"], stride=p["stride"], relu=False)
                if "down" in p else x)
    # residual add + ReLU folded into the c3 (1x1) GEMM epilogue
    return conv_bn(out, p["c3"], relu=True, res=identity)


def resnet_layer(x, blocks):
    for p in blocks:
        x = bottleneck_forward(x, p)
    return x


def rfb_forward(x, p):
    oc = p["cout"]
    z = conv_bn(x, p["in_fused"], relu=True)     # fused 1x1 heads (5*oc ch)
    x0 = z[..., 0 * oc:1 * oc]
    x1 = z[..., 1 * oc:2 * oc]
    x2 = z[..., 2 * oc:3 * oc]
    x3 = z[..., 3 * oc:4 * oc]
    x_res = z[..., 4 * oc:5 * oc]

    x1 = conv_bn(x1, p["b1"][0], padding=(0, 1))
    x1 = conv_bn(x1, p["b1"][1], padding=(1, 0))
    x1 = conv_bn(x1, p["b1"][2], padding=3, dilation=3)

    x2 = conv_bn(x2, p["b2"][0], padding=(0, 2))
    x2 = conv_bn(x2, p["b2"][1], padding=(2, 0))
    x2 = conv_bn(x2, p["b2"][2], padding=5, dilation=5)

    x3 = conv_bn(x3, p["b3"][0], padding=(0, 3))
    x3 = conv_bn(x3, p["b3"][1], padding=(3, 0))
    x3 = conv_bn(x3, p["b3"][2], padding=7, dilation=7)

    x_cat = conv_bn(jnp.concatenate([x0, x1, x2, x3], axis=-1),
                    p["conv_cat"], padding=1)
    return jnp.maximum(x_cat + x_res, 0.0)


def agg_forward(x1, x2, x3, p):
    c = x1.shape[-1]
    up = lambda t: upsample_bilinear(t, 2)
    ux1 = up(x1)
    t = conv_bn(ux1, p["cu14"], padding=1)        # fused cu1 + cu4 (2C outputs)
    cu1_o, cu4_o = t[..., :c], t[..., c:]
    x2_1 = cu1_o * x2
    x3_1 = (conv_bn(up(ux1), p["cu2"], padding=1)
            * conv_bn(up(x2), p["cu3"], padding=1) * x3)
    x2_2 = jnp.concatenate([x2_1, cu4_o], axis=-1)
    x2_2 = conv_bn(x2_2, p["cc2"], padding=1)
    x3_2 = jnp.concatenate([x3_1, conv_bn(up(x2_2), p["cu5"], padding=1)],
                           axis=-1)
    x3_2 = conv_bn(x3_2, p["cc3"], padding=1)
    y = conv_bn(x3_2, p["conv4"], padding=1)
    return conv1x1_out(y, p["conv5"])


def unet_forward(P, x_nchw):
    x = jnp.transpose(x_nchw, (0, 2, 3, 1)).astype(jnp.bfloat16)  # NCHW->NHWC

    # layer0: 7x7/s2 conv + BN + ReLU + 3x3/s2 maxpool
    x0 = conv_bn(x, P["enc_conv1"], stride=2, padding=3, relu=True)
    x0 = maxpool_3x3_s2_p1(x0)

    x1 = resnet_layer(x0, P["layer1"])
    x2 = resnet_layer(x1, P["layer2"])
    x3 = resnet_layer(x2, P["layer3"])
    x4 = resnet_layer(x3, P["layer4"])

    r1 = rfb_forward(x1, P["rfb1"])
    r2 = rfb_forward(x2, P["rfb2"])
    r3 = rfb_forward(x3, P["rfb3"])
    r4 = rfb_forward(x4, P["rfb4"])

    agg_map = agg_forward(r4, r3, r2, P["agg"])
    agg_map_up = upsample_bilinear(agg_map, 8)

    up4 = conv_transpose_2x2(r4, P["up4"])
    up4 = conv_bn(jnp.concatenate([up4, r3], axis=-1), P["dec_conv4"], padding=1)
    up3 = conv_transpose_2x2(up4, P["up3"])
    up3 = conv_bn(jnp.concatenate([up3, r2], axis=-1), P["dec_conv3"], padding=1)
    up2 = conv_transpose_2x2(up3, P["up2"])
    up2 = conv_bn(jnp.concatenate([up2, r1], axis=-1), P["dec_conv2"], padding=1)
    up1 = conv_transpose_2x2(up2, P["up1"])
    up1 = conv_bn(jnp.concatenate([up1, upsample_bilinear(r1, 2)], axis=-1),
                  P["dec_conv1"], padding=1)

    out = conv1x1_out(up1, P["final_conv"])
    out = upsample_bilinear(out, 2)

    out_nchw = jnp.transpose(out, (0, 3, 1, 2)).astype(jnp.float32)
    agg_nchw = jnp.transpose(agg_map_up, (0, 3, 1, 2)).astype(jnp.float32)
    return out_nchw, agg_nchw


if __name__ == "__main__":
    params = init_unet_params(in_channels=3, base_channels=32)
    x = jax.random.normal(jax.random.PRNGKey(0), (1, 3, 64, 64), jnp.float32)
    out, agg_map_up = unet_forward(params, x)
    jax.block_until_ready((out, agg_map_up))
    assert out.shape == (1, 1, 64, 64), out.shape
    assert agg_map_up.shape == (1, 1, 64, 64), agg_map_up.shape
    assert jnp.all(jnp.isfinite(out)) and jnp.all(jnp.isfinite(agg_map_up))
    print("KERNEL_OK")
</pallas_src>

<mosaic_0001>
module attributes {stable_mosaic.version = 11 : i64} {
  func.func @_mm_kernel(%arg0: i32, %arg1: i32, %arg2: memref<512x147xbf16, #tpu.memory_space<vmem>>, %arg3: memref<147x64xbf16, #tpu.memory_space<vmem>>, %arg4: memref<1x64xf32, #tpu.memory_space<vmem>>, %arg5: memref<512x64xbf16, #tpu.memory_space<vmem>>) attributes {dimension_semantics = [#tpu.dimension_semantics<parallel>, #tpu.dimension_semantics<parallel>], iteration_bounds = array<i64: 2, 1>, scalar_prefetch = 0 : i64, scratch_operands = 0 : i64, tpu.core_type = #tpu.core_type<tc>, window_params = [{transform_indices = @transform_0, window_bounds = array<i64: 512, 147>}, {transform_indices = @transform_1, window_bounds = array<i64: 147, 64>}, {transform_indices = @transform_2, window_bounds = array<i64: 1, 64>}, {transform_indices = @transform_3, window_bounds = array<i64: 512, 64>}]} {
    %c0 = arith.constant 0 : index
    %c0_0 = arith.constant 0 : index
    %0 = vector.load %arg2[%c0, %c0_0] : memref<512x147xbf16, #tpu.memory_space<vmem>>, vector<512x147xbf16>
    %c0_1 = arith.constant 0 : index
    %c0_2 = arith.constant 0 : index
    %1 = vector.load %arg3[%c0_1, %c0_2] : memref<147x64xbf16, #tpu.memory_space<vmem>>, vector<147x64xbf16>
    %cst = arith.constant dense<0.000000e+00> : vector<512x64xf32>
    %2 = tpu.matmul %0, %1, %cst {dimension_numbers = #tpu.dot_dimension_numbers<[1], [0], [0], [1], [0, 0, 1, 1], [], []>} : vector<512x147xbf16>, vector<147x64xbf16>, vector<512x64xf32> -> vector<512x64xf32>
    %c0_3 = arith.constant 0 : index
    %c0_4 = arith.constant 0 : index
    %3 = vector.load %arg4[%c0_3, %c0_4] : memref<1x64xf32, #tpu.memory_space<vmem>>, vector<1x64xf32>
    %4 = vector.broadcast %3 : vector<1x64xf32> to vector<512x64xf32>
    %5 = arith.addf %2, %4 : vector<512x64xf32>
    %cst_5 = arith.constant 0.000000e+00 : f32
    %6 = vector.broadcast %cst_5 : f32 to vector<512x64xf32>
    %7 = arith.maximumf %5, %6 : vector<512x64xf32>
    %8 = arith.truncf %7 : vector<512x64xf32> to vector<512x64xbf16>
    %c0_6 = arith.constant 0 : index
    %c0_7 = arith.constant 0 : index
    %9 = vector.load %arg5[%c0_6, %c0_7] : memref<512x64xbf16, #tpu.memory_space<vmem>>, vector<512x64xbf16>
    tpu.vector_store %arg5[%c0_6, %c0_7], %8 {strides = array<i32>} : memref<512x64xbf16, #tpu.memory_space<vmem>>, vector<512x64xbf16>,
    return
  }
  func.func @transform_0(%arg0: i32, %arg1: i32) -> (i32, i32) {
    %c0_i32 = arith.constant 0 : i32
    %c0_i32_0 = arith.constant 0 : i32
    return %arg0, %c0_i32 : i32, i32
  }
  func.func @transform_1(%arg0: i32, %arg1: i32) -> (i32, i32) {
    %c0_i32 = arith.constant 0 : i32
    %c0_i32_0 = arith.constant 0 : i32
    return %c0_i32, %arg1 : i32, i32
  }
  func.func @transform_2(%arg0: i32, %arg1: i32) -> (i32, i32) {
    %c0_i32 = arith.constant 0 : i32
    %c0_i32_0 = arith.constant 0 : i32
    return %c0_i32, %arg1 : i32, i32
  }
  func.func @transform_3(%arg0: i32, %arg1: i32) -> (i32, i32) {
    %c0_i32 = arith.constant 0 : i32
    return %arg0, %arg1 : i32, i32
  }
}

</mosaic_0001>

<llo_original>
// kernel: fused_matmul.1
$region0: #{fused_matmul.1}
  #allocation0 [shape = 'u32[]', space=smem, size = 0x4, offset = 0x4, fixed_abs, tag = 'smem constant byte address 0x4 - core index']
  #allocation1 [shape = 'u32[72,128]{1,0:T(1,128)}', space=vmem, size = 0x9000, scoped, tag = 'internal scratch']
  %s0 = inlined_call_operand.vmem [shape: bf16[1024,147], index: 0, kind: input, shape index: {}]
  %s1 = inlined_call_operand.vmem [shape: bf16[147,64], index: 1, kind: input, shape index: {}]
  %s2 = inlined_call_operand.vmem [shape: f32[1,64], index: 2, kind: input, shape index: {}]
  %s3 = inlined_call_operand.vmem [shape: bf16[1024,64], index: 3, kind: output, shape index: {}]
  %s4 = sld [smem:[#allocation0]]
  $region45: #{fused_matmul.1} parent=0
    _
  %s6 = ssub.s32 1, %s4
  %s7 = scalar_select 0, %s6, %s4
  loop: start=0, step=1, limit=4
  $region2: #{fused_matmul.1} parent=0 // loop_pre_header
    _
  $region3: #{fused_matmul.1} parent=0 // loop_header
    %s9 = sphi 0, %s13
    %p10 = scmp.ge.s32.totalorder %s9, 4
    %s16 = sphi 0, %s28
    %s17 = sphi 0, %s24
    %s18 = sphi 0, %s16
    %s19 = sphi 0, %s17
    %s20 = sphi 0, %s18
    %s21 = sphi 0, %s19
    %s31 = sphi 0, %s33
    %s34 = sphi 0, %s31
    %s35 = sphi 0, %s34
    %s51 = sphi 0, %s35
    %s57 = sphi 0, %s59
    %s60 = sphi 0, %s57
    %s61 = sphi 0, %s60
    %s77 = sphi 0, %s61
    %s83 = sphi 0, %s85
    %s86 = sphi 0, %s83
    %s87 = sphi 0, %s86
    %s103 = sphi 0, %s87
    %s111 = sphi 0, %s113
    %s114 = sphi 0, %s111
    %s115 = sphi 0, %s114
    %s131 = sphi 0, %s115
  $region4: #{fused_matmul.1} parent=0 // loop_header_branch
    %12 = sbr.rel (%p10) target = $region8
  $region5: #{fused_matmul.1} parent=0 // loop_body
    %s14 = ssub.s32 %s9, 1
    %s15 = ssub.s32 %s9, 2
    %s22 = sadd.s32 1, %s17
    %p23 = scmp.ge.s32.totalorder %s22, 1
    %s24 = scalar_select %p23, 0, %s22
    %s25 = sadd.s32 1, %s16
    %s26 = scalar_select %p23, %s25, %s16
    %p27 = scmp.ge.s32.totalorder %s26, 2
    %s28 = scalar_select %p27, 0, %s26
    %s29 = ssub.s32 %s16, %s28
    %p30 = scmp.eq.s32.totalorder %s29, 0
    %s32 = sadd.s32 %s31, 1
    %s33 = scalar_select %p30, %s31, %s32
    %p36 = pneg %p30
    %p37 = scmp.eq.s32.totalorder %s9, 1
    %p38 = por %p36, %p37
    %p39 = scmp.ne.s32.totalorder %s31, %s34
    %p40 = scmp.eq.s32.totalorder %s9, 0
    %p41 = por %p39, %p40
    %p42 = scmp.ne.s32.totalorder %s31, %s34
    %p43 = scmp.eq.s32.totalorder %s14, 1
    %p44 = por %p42, %p43
    %p45 = scmp.ne.s32.totalorder %s34, %s35
    %p46 = scmp.eq.s32.totalorder %s14, 0
    %p47 = por %p45, %p46
    %p48 = scmp.ne.s32.totalorder %s34, %s35
    %p49 = scmp.eq.s32.totalorder %s15, 1
    %p50 = por %p48, %p49
    %p52 = scmp.ne.s32.totalorder %s35, %s51
    %p53 = scmp.eq.s32.totalorder %s15, 0
    %p54 = por %p52, %p53
    %s55 = ssub.s32 %s17, %s24
    %p56 = scmp.eq.s32.totalorder %s55, 0
    %s58 = sadd.s32 %s57, 1
    %s59 = scalar_select %p56, %s57, %s58
    %p62 = pneg %p56
    %p63 = scmp.eq.s32.totalorder %s9, 1
    %p64 = por %p62, %p63
    %p65 = scmp.ne.s32.totalorder %s57, %s60
    %p66 = scmp.eq.s32.totalorder %s9, 0
    %p67 = por %p65, %p66
    %p68 = scmp.ne.s32.totalorder %s57, %s60
    %p69 = scmp.eq.s32.totalorder %s14, 1
    %p70 = por %p68, %p69
    %p71 = scmp.ne.s32.totalorder %s60, %s61
    %p72 = scmp.eq.s32.totalorder %s14, 0
    %p73 = por %p71, %p72
    %p74 = scmp.ne.s32.totalorder %s60, %s61
    %p75 = scmp.eq.s32.totalorder %s15, 1
    %p76 = por %p74, %p75
    %p78 = scmp.ne.s32.totalorder %s61, %s77
    %p79 = scmp.eq.s32.totalorder %s15, 0
    %p80 = por %p78, %p79
    %s81 = ssub.s32 %s17, %s24
    %p82 = scmp.eq.s32.totalorder %s81, 0
    %s84 = sadd.s32 %s83, 1
    %s85 = scalar_select %p82, %s83, %s84
    %p88 = pneg %p82
    %p89 = scmp.eq.s32.totalorder %s9, 1
    %p90 = por %p88, %p89
    %p91 = scmp.ne.s32.totalorder %s83, %s86
    %p92 = scmp.eq.s32.totalorder %s9, 0
    %p93 = por %p91, %p92
    %p94 = scmp.ne.s32.totalorder %s83, %s86
    %p95 = scmp.eq.s32.totalorder %s14, 1
    %p96 = por %p94, %p95
    %p97 = scmp.ne.s32.totalorder %s86, %s87
    %p98 = scmp.eq.s32.totalorder %s14, 0
    %p99 = por %p97, %p98
    %p100 = scmp.ne.s32.totalorder %s86, %s87
    %p101 = scmp.eq.s32.totalorder %s15, 1
    %p102 = por %p100, %p101
    %p104 = scmp.ne.s32.totalorder %s87, %s103
    %p105 = scmp.eq.s32.totalorder %s15, 0
    %p106 = por %p104, %p105
    %s107 = ssub.s32 %s16, %s28
    %s108 = ssub.s32 %s17, %s24
    %s109 = sor.u32 %s107, %s108
    %p110 = scmp.eq.s32.totalorder %s109, 0
    %s112 = sadd.s32 %s111, 1
    %s113 = scalar_select %p110, %s111, %s112
    %p116 = pneg %p110
    %p117 = scmp.eq.s32.totalorder %s9, 1
    %p118 = por %p116, %p117
    %p119 = scmp.ne.s32.totalorder %s111, %s114
    %p120 = scmp.eq.s32.totalorder %s9, 0
    %p121 = por %p119, %p120
    %p122 = scmp.ne.s32.totalorder %s111, %s114
    %p123 = scmp.eq.s32.totalorder %s14, 1
    %p124 = por %p122, %p123
    %p125 = scmp.ne.s32.totalorder %s114, %s115
    %p126 = scmp.eq.s32.totalorder %s14, 0
    %p127 = por %p125, %p126
    %p128 = scmp.ne.s32.totalorder %s114, %s115
    %p129 = scmp.eq.s32.totalorder %s15, 1
    %p130 = por %p128, %p129
    %p132 = scmp.ne.s32.totalorder %s115, %s131
    %p133 = scmp.eq.s32.totalorder %s15, 0
    %p134 = por %p132, %p133
    %p135 = scmp.le.s32.totalorder 1, %s9
    %p136 = scmp.lt.s32.totalorder %s9, 3
    %p137 = pnand %p135, %p136
    %p138 = pneg %p137
    // Predicated region
    $region9: #{fused_matmul.1} parent=5 // pred_check
      _
    $region10: #{fused_matmul.1} parent=5 // pred_check_branch
      %140 = sbr.rel (%p137) target = $region12
    $region11: #{fused_matmul.1} parent=5 // pred_region
      %s141 = ssub.s32 %s9, 1
      // Predicated region
      $region13: #{fused_matmul.1} parent=11 // pred_check
        %p142 = pneg %p73
      $region14: #{fused_matmul.1} parent=11 // pred_check_branch
        %144 = sbr.rel (%p142) target = $region16
      $region15: #{fused_matmul.1} parent=11 // pred_region
        %p145 = scmp.lt.s32.totalorder %s19, 0
        %s146 = scalar_select %p145, %s19, 0
        %s147 = smul.addr %s146, 4
        %s148 = scalar_lea.vmem %s1, %s147
      $region16: #{fused_matmul.1} parent=11 // pred_fallthru
        _
      // Predicated region
      $region17: #{fused_matmul.1} parent=11 // pred_check
        %p149 = pneg %p99
      $region18: #{fused_matmul.1} parent=11 // pred_check_branch
        %151 = sbr.rel (%p149) target = $region20
      $region19: #{fused_matmul.1} parent=11 // pred_region
        %p152 = scmp.lt.s32.totalorder %s19, 0
        %s153 = scalar_select %p152, %s19, 0
        %s154 = scalar_lea.vmem %s2, %s153
      $region20: #{fused_matmul.1} parent=11 // pred_fallthru
        _
    $region12: #{fused_matmul.1} parent=5 // pred_fallthru
      _
    %p155 = scmp.lt.s32.totalorder %s9, 2
    // Predicated region
    $region21: #{fused_matmul.1} parent=5 // pred_check
      %p156 = pneg %p155
    $region22: #{fused_matmul.1} parent=5 // pred_check_branch
      %158 = sbr.rel (%p156) target = $region24
    $region23: #{fused_matmul.1} parent=5 // pred_region
      // Predicated region
      $region25: #{fused_matmul.1} parent=23 // pred_check
        %p159 = pneg %p41
      $region26: #{fused_matmul.1} parent=23 // pred_check_branch
        %161 = sbr.rel (%p159) target = $region28
      $region27: #{fused_matmul.1} parent=23 // pred_region
        %s162 = smul.u32 64, %s16
        %p163 = scmp.lt.s32.totalorder %s162, 127
        %s164 = scalar_select %p163, %s162, 127
        %s165 = smul.addr %s164, 2
        %s166 = smul.addr %s165, 4
        %s167 = scalar_lea.vmem %s0, %s166
        %s168 = smul.u32 64, %s16
      $region28: #{fused_matmul.1} parent=23 // pred_fallthru
        _
    $region24: #{fused_matmul.1} parent=5 // pred_fallthru
      _
    %p169 = scmp.le.s32.totalorder 1, %s9
    %p170 = scmp.lt.s32.totalorder %s9, 3
    %p171 = pnand %p169, %p170
    %p172 = pneg %p171
    // Predicated region
    $region29: #{fused_matmul.1} parent=5 // pred_check
      _
    $region30: #{fused_matmul.1} parent=5 // pred_check_branch
      %174 = sbr.rel (%p171) target = $region32
    $region31: #{fused_matmul.1} parent=5 // pred_region
      %s175 = ssub.s32 %s9, 1
      %s176 = smul.u32 64, %s18
      %p177 = scmp.lt.s32.totalorder %s176, 127
      %s178 = scalar_select %p177, %s176, 127
      %s179 = smul.addr %s178, 2
      %s180 = smul.addr %s179, 4
      %s181 = scalar_lea.vmem %s0, %s180
      %p182 = pneg %p47
      %p183 = pneg %p44
      %p184 = scmp.lt.s32.totalorder %s19, 0
      %s185 = scalar_select %p184, %s19, 0
      %s186 = smul.addr %s185, 4
      %s187 = scalar_lea.vmem %s1, %s186
      %p188 = pneg %p73
      %p189 = pneg %p70
      %p190 = scmp.lt.s32.totalorder %s19, 0
      %s191 = scalar_select %p190, %s19, 0
      %s192 = scalar_lea.vmem %s2, %s191
      %p193 = pneg %p99
      %p194 = pneg %p96
      %p195 = pneg %p127
      %p196 = pneg %p124
      %s197 = smul.u32 64, %s18
      %p198 = scmp.lt.s32.totalorder %s197, 127
      %s199 = scalar_select %p198, %s197, 127
      %p200 = scmp.lt.s32.totalorder %s19, 0
      %s201 = scalar_select %p200, %s19, 0
      %s202 = sadd.s32 %s201, %s199
      %s203 = smul.addr %s202, 4
      %s204 = scalar_lea.vmem %s3, %s203
      %s205 = smul.u32 64, %s18
      %p206 = scmp.lt.s32.totalorder %s205, 127
      %s207 = scalar_select %p206, %s205, 127
      %s208 = smul.addr %s207, 2
      %s209 = smul.addr %s208, 4
      %s210 = scalar_lea.vmem %s0, %s209
      %s211 = smul.u32 64, %s18
      %p212 = scmp.lt.s32.totalorder %s19, 0
      %s213 = scalar_select %p212, %s19, 0
      %s214 = smul.addr %s213, 4
      %s215 = scalar_lea.vmem %s1, %s214
      %p216 = scmp.lt.s32.totalorder %s19, 0
      %s217 = scalar_select %p216, %s19, 0
      %s218 = scalar_lea.vmem %s2, %s217
      %s219 = smul.u32 64, %s18
      %p220 = scmp.lt.s32.totalorder %s219, 127
      %s221 = scalar_select %p220, %s219, 127
      %p222 = scmp.lt.s32.totalorder %s19, 0
      %s223 = scalar_select %p222, %s19, 0
      %s224 = sadd.s32 %s223, %s221
      %s225 = smul.addr %s224, 4
      %s226 = scalar_lea.vmem %s3, %s225
      %s227 = smul.u32 64, %s18
      %v229 = vld [vmem:[%s210] sm:$0xff]
      %v230 = vld [vmem:[%s210 + $0x8] sm:$0xff]
      %v231 = vld [vmem:[%s210 + $0x10] sm:$0xff]
      %v232 = vld [vmem:[%s210 + $0x18] sm:$0xff]
      %v233 = vld [vmem:[%s210 + $0x20] sm:$0xff]
      %v234 = vld [vmem:[%s210 + $0x28] sm:$0xff]
      %v235 = vld [vmem:[%s210 + $0x30] sm:$0xff]
      %v236 = vld [vmem:[%s210 + $0x38] sm:$0xff]
      %v237 = vld [vmem:[%s210 + $0x40] sm:$0xff]
      %v238 = vld [vmem:[%s210 + $0x48] sm:$0xff]
      %v239 = vld [vmem:[%s210 + $0x50] sm:$0xff]
      %v240 = vld [vmem:[%s210 + $0x58] sm:$0xff]
      %v241 = vld [vmem:[%s210 + $0x60] sm:$0xff]
      %v242 = vld [vmem:[%s210 + $0x68] sm:$0xff]
      %v243 = vld [vmem:[%s210 + $0x70] sm:$0xff]
      %v244 = vld [vmem:[%s210 + $0x78] sm:$0xff]
      %v245 = vld [vmem:[%s210 + $0x80] sm:$0xff]
      %v246 = vld [vmem:[%s210 + $0x88] sm:$0xff]
      %v247 = vld [vmem:[%s210 + $0x90] sm:$0xff]
      %v248 = vld [vmem:[%s210 + $0x98] sm:$0xff]
      %v249 = vld [vmem:[%s210 + $0xa0] sm:$0xff]
      %v250 = vld [vmem:[%s210 + $0xa8] sm:$0xff]
      %v251 = vld [vmem:[%s210 + $0xb0] sm:$0xff]
      %v252 = vld [vmem:[%s210 + $0xb8] sm:$0xff]
      %v253 = vld [vmem:[%s210 + $0xc0] sm:$0xff]
      %v254 = vld [vmem:[%s210 + $0xc8] sm:$0xff]
      %v255 = vld [vmem:[%s210 + $0xd0] sm:$0xff]
      %v256 = vld [vmem:[%s210 + $0xd8] sm:$0xff]
      %v257 = vld [vmem:[%s210 + $0xe0] sm:$0xff]
      %v258 = vld [vmem:[%s210 + $0xe8] sm:$0xff]
      %v259 = vld [vmem:[%s210 + $0xf0] sm:$0xff]
      %v260 = vld [vmem:[%s210 + $0xf8] sm:$0xff]
      %v261 = vld [vmem:[%s210 + $0x100] sm:$0xff]
      %v262 = vld [vmem:[%s210 + $0x108] sm:$0xff]
      %v263 = vld [vmem:[%s210 + $0x110] sm:$0xff]
      %v264 = vld [vmem:[%s210 + $0x118] sm:$0xff]
      %v265 = vld [vmem:[%s210 + $0x120] sm:$0xff]
      %v266 = vld [vmem:[%s210 + $0x128] sm:$0xff]
      %v267 = vld [vmem:[%s210 + $0x130] sm:$0xff]
      %v268 = vld [vmem:[%s210 + $0x138] sm:$0xff]
      %v269 = vld [vmem:[%s210 + $0x140] sm:$0xff]
      %v270 = vld [vmem:[%s210 + $0x148] sm:$0xff]
      %v271 = vld [vmem:[%s210 + $0x150] sm:$0xff]
      %v272 = vld [vmem:[%s210 + $0x158] sm:$0xff]
      %v273 = vld [vmem:[%s210 + $0x160] sm:$0xff]
      %v274 = vld [vmem:[%s210 + $0x168] sm:$0xff]
      %v275 = vld [vmem:[%s210 + $0x170] sm:$0xff]
      %v276 = vld [vmem:[%s210 + $0x178] sm:$0xff]
      %v277 = vld [vmem:[%s210 + $0x180] sm:$0xff]
      %v278 = vld [vmem:[%s210 + $0x188] sm:$0xff]
      %v279 = vld [vmem:[%s210 + $0x190] sm:$0xff]
      %v280 = vld [vmem:[%s210 + $0x198] sm:$0xff]
      %v281 = vld [vmem:[%s210 + $0x1a0] sm:$0xff]
      %v282 = vld [vmem:[%s210 + $0x1a8] sm:$0xff]
      %v283 = vld [vmem:[%s210 + $0x1b0] sm:$0xff]
      %v284 = vld [vmem:[%s210 + $0x1b8] sm:$0xff]
      %v285 = vld [vmem:[%s210 + $0x1c0] sm:$0xff]
      %v286 = vld [vmem:[%s210 + $0x1c8] sm:$0xff]
      %v287 = vld [vmem:[%s210 + $0x1d0] sm:$0xff]
      %v288 = vld [vmem:[%s210 + $0x1d8] sm:$0xff]
      %v289 = vld [vmem:[%s210 + $0x1e0] sm:$0xff]
      %v290 = vld [vmem:[%s210 + $0x1e8] sm:$0xff]
      %v291 = vld [vmem:[%s210 + $0x1f0] sm:$0xff]
      %v292 = vld [vmem:[%s210 + $0x1f8] sm:$0xff]
      %v293 = vld [vmem:[%s215] sm:$0xf]
      %v294 = vld [vmem:[%s215 + $0x4] sm:$0xf]
      %v295 = vld [vmem:[%s215 + $0x8] sm:$0xf]
      %v296 = vld [vmem:[%s215 + $0xc] sm:$0xf]
      %v297 = vld [vmem:[%s215 + $0x10] sm:$0xf]
      %v298 = vld [vmem:[%s215 + $0x14] sm:$0xf]
      %v299 = vld [vmem:[%s215 + $0x18] sm:$0xf]
      %v300 = vld [vmem:[%s215 + $0x1c] sm:$0xf]
      %v301 = vld [vmem:[%s215 + $0x20] sm:$0xf]
      %v302 = vld [vmem:[%s215 + $0x24] sm:$0xf]
      %v303 = vld [vmem:[%s215 + $0x28] sm:$0xf]
      %v304 = vld [vmem:[%s215 + $0x2c] sm:$0xf]
      %v305 = vld [vmem:[%s215 + $0x30] sm:$0xf]
      %v306 = vld [vmem:[%s215 + $0x34] sm:$0xf]
      %v307 = vld [vmem:[%s215 + $0x38] sm:$0xf]
      %v308 = vld [vmem:[%s215 + $0x3c] sm:$0xf]
      %v309 = vld [vmem:[%s215 + $0x40] sm:$0xf]
      %v310 = vld [vmem:[%s215 + $0x44] sm:$0xf]
      %v311 = vld [vmem:[%s215 + $0x48] sm:$0x3]
      %v312 = vld [vmem:[%s218] sm:$0x1]
      %v314 = vperm.slane %v312, 0
      %v380 = vunpack.c.l.b16 %v229
      %v381 = vunpack.c.h.b16 %v229
      %v382 = vunpack.c.l.b16 %v230
      %v383 = vunpack.c.h.b16 %v230
      %v384 = vunpack.c.l.b16 %v231
      %v385 = vunpack.c.h.b16 %v231
      %v386 = vunpack.c.l.b16 %v232
      %v387 = vunpack.c.h.b16 %v232
      %v388 = vunpack.c.l.b16 %v233
      %v389 = vunpack.c.h.b16 %v233
      %v390 = vunpack.c.l.b16 %v234
      %v391 = vunpack.c.h.b16 %v234
      %v392 = vunpack.c.l.b16 %v235
      %v393 = vunpack.c.h.b16 %v235
      %v394 = vunpack.c.l.b16 %v236
      %v395 = vunpack.c.h.b16 %v236
      %v396 = vunpack.c.l.b16 %v237
      %v397 = vunpack.c.h.b16 %v237
      %v398 = vunpack.c.l.b16 %v238
      %v399 = vunpack.c.h.b16 %v238
      %v400 = vunpack.c.l.b16 %v239
      %v401 = vunpack.c.h.b16 %v239
      %v402 = vunpack.c.l.b16 %v240
      %v403 = vunpack.c.h.b16 %v240
      %v404 = vunpack.c.l.b16 %v241
      %v405 = vunpack.c.h.b16 %v241
      %v406 = vunpack.c.l.b16 %v242
      %v407 = vunpack.c.h.b16 %v242
      %v408 = vunpack.c.l.b16 %v243
      %v409 = vunpack.c.h.b16 %v243
      %v410 = vunpack.c.l.b16 %v244
      %v411 = vunpack.c.h.b16 %v244
      %v412 = vunpack.c.l.b16 %v245
      %v413 = vunpack.c.h.b16 %v245
      %v414 = vunpack.c.l.b16 %v246
      %v415 = vunpack.c.h.b16 %v246
      %v416 = vunpack.c.l.b16 %v247
      %v417 = vunpack.c.h.b16 %v247
      %v418 = vunpack.c.l.b16 %v248
      %v419 = vunpack.c.h.b16 %v248
      %v420 = vunpack.c.l.b16 %v249
      %v421 = vunpack.c.h.b16 %v249
      %v422 = vunpack.c.l.b16 %v250
      %v423 = vunpack.c.h.b16 %v250
      %v424 = vunpack.c.l.b16 %v251
      %v425 = vunpack.c.h.b16 %v251
      %v426 = vunpack.c.l.b16 %v252
      %v427 = vunpack.c.h.b16 %v252
      %v428 = vunpack.c.l.b16 %v253
      %v429 = vunpack.c.h.b16 %v253
      %v430 = vunpack.c.l.b16 %v254
      %v431 = vunpack.c.h.b16 %v254
      %v432 = vunpack.c.l.b16 %v255
      %v433 = vunpack.c.h.b16 %v255
      %v434 = vunpack.c.l.b16 %v256
      %v435 = vunpack.c.h.b16 %v256
      %v436 = vunpack.c.l.b16 %v257
      %v437 = vunpack.c.h.b16 %v257
      %v438 = vunpack.c.l.b16 %v258
      %v439 = vunpack.c.h.b16 %v258
      %v440 = vunpack.c.l.b16 %v259
      %v441 = vunpack.c.h.b16 %v259
      %v442 = vunpack.c.l.b16 %v260
      %v443 = vunpack.c.h.b16 %v260
      %v444 = vunpack.c.l.b16 %v261
      %v445 = vunpack.c.h.b16 %v261
      %v446 = vunpack.c.l.b16 %v262
      %v447 = vunpack.c.h.b16 %v262
      %v448 = vunpack.c.l.b16 %v263
      %v449 = vunpack.c.h.b16 %v263
      %v450 = vunpack.c.l.b16 %v264
      %v451 = vunpack.c.h.b16 %v264
      %v452 = vunpack.c.l.b16 %v265
      %v453 = vunpack.c.h.b16 %v265
      %v454 = vunpack.c.l.b16 %v266
      %v455 = vunpack.c.h.b16 %v266
      %v456 = vunpack.c.l.b16 %v267
      %v457 = vunpack.c.h.b16 %v267
      %v458 = vunpack.c.l.b16 %v268
      %v459 = vunpack.c.h.b16 %v268
      %v460 = vunpack.c.l.b16 %v269
      %v461 = vunpack.c.h.b16 %v269
      %v462 = vunpack.c.l.b16 %v270
      %v463 = vunpack.c.h.b16 %v270
      %v464 = vunpack.c.l.b16 %v271
      %v465 = vunpack.c.h.b16 %v271
      %v466 = vunpack.c.l.b16 %v272
      %v467 = vunpack.c.h.b16 %v272
      %v468 = vunpack.c.l.b16 %v273
      %v469 = vunpack.c.h.b16 %v273
      %v470 = vunpack.c.l.b16 %v274
      %v471 = vunpack.c.h.b16 %v274
      %v472 = vunpack.c.l.b16 %v275
      %v473 = vunpack.c.h.b16 %v275
      %v474 = vunpack.c.l.b16 %v276
      %v475 = vunpack.c.h.b16 %v276
      %v476 = vunpack.c.l.b16 %v277
      %v477 = vunpack.c.h.b16 %v277
      %v478 = vunpack.c.l.b16 %v278
      %v479 = vunpack.c.h.b16 %v278
      %v480 = vunpack.c.l.b16 %v279
      %v481 = vunpack.c.h.b16 %v279
      %v482 = vunpack.c.l.b16 %v280
      %v483 = vunpack.c.h.b16 %v280
      %v484 = vunpack.c.l.b16 %v281
      %v485 = vunpack.c.h.b16 %v281
      %v486 = vunpack.c.l.b16 %v282
      %v487 = vunpack.c.h.b16 %v282
      %v488 = vunpack.c.l.b16 %v283
      %v489 = vunpack.c.h.b16 %v283
      %v490 = vunpack.c.l.b16 %v284
      %v491 = vunpack.c.h.b16 %v284
      %v492 = vunpack.c.l.b16 %v285
      %v493 = vunpack.c.h.b16 %v285
      %v494 = vunpack.c.l.b16 %v286
      %v495 = vunpack.c.h.b16 %v286
      %v496 = vunpack.c.l.b16 %v287
      %v497 = vunpack.c.h.b16 %v287
      %v498 = vunpack.c.l.b16 %v288
      %v499 = vunpack.c.h.b16 %v288
      %v500 = vunpack.c.l.b16 %v289
      %v501 = vunpack.c.h.b16 %v289
      %v502 = vunpack.c.l.b16 %v290
      %v503 = vunpack.c.h.b16 %v290
      %v504 = vunpack.c.l.b16 %v291
      %v505 = vunpack.c.h.b16 %v291
      %v506 = vunpack.c.l.b16 %v292
      %v507 = vunpack.c.h.b16 %v292
      %v508 = vpack.c.b16 %v382, %v380
      %v509 = vpack.c.b16 %v383, %v381
      %v510 = vpack.c.b16 %v386, %v384
      %v511 = vpack.c.b16 %v387, %v385
      %v512 = vpack.c.b16 %v390, %v388
      %v513 = vpack.c.b16 %v391, %v389
      %v514 = vpack.c.b16 %v394, %v392
      %v515 = vpack.c.b16 %v395, %v393
      %v516 = vpack.c.b16 %v398, %v396
      %v517 = vpack.c.b16 %v399, %v397
      %v518 = vpack.c.b16 %v402, %v400
      %v519 = vpack.c.b16 %v403, %v401
      %v520 = vpack.c.b16 %v406, %v404
      %v521 = vpack.c.b16 %v407, %v405
      %v522 = vpack.c.b16 %v410, %v408
      %v523 = vpack.c.b16 %v411, %v409
      %v524 = vpack.c.b16 %v414, %v412
      %v525 = vpack.c.b16 %v415, %v413
      %v526 = vpack.c.b16 %v418, %v416
      %v527 = vpack.c.b16 %v419, %v417
      %v528 = vpack.c.b16 %v422, %v420
      %v529 = vpack.c.b16 %v423, %v421
      %v530 = vpack.c.b16 %v426, %v424
      %v531 = vpack.c.b16 %v427, %v425
      %v532 = vpack.c.b16 %v430, %v428
      %v533 = vpack.c.b16 %v431, %v429
      %v534 = vpack.c.b16 %v434, %v432
      %v535 = vpack.c.b16 %v435, %v433
      %v536 = vpack.c.b16 %v438, %v436
      %v537 = vpack.c.b16 %v439, %v437
      %v538 = vpack.c.b16 %v442, %v440
      %v539 = vpack.c.b16 %v443, %v441
      %v540 = vpack.c.b16 %v446, %v444
      %v541 = vpack.c.b16 %v447, %v445
      %v542 = vpack.c.b16 %v450, %v448
      %v543 = vpack.c.b16 %v451, %v449
      %v544 = vpack.c.b16 %v454, %v452
      %v545 = vpack.c.b16 %v455, %v453
      %v546 = vpack.c.b16 %v458, %v456
      %v547 = vpack.c.b16 %v459, %v457
      %v548 = vpack.c.b16 %v462, %v460
      %v549 = vpack.c.b16 %v463, %v461
      %v550 = vpack.c.b16 %v466, %v464
      %v551 = vpack.c.b16 %v467, %v465
      %v552 = vpack.c.b16 %v470, %v468
      %v553 = vpack.c.b16 %v471, %v469
      %v554 = vpack.c.b16 %v474, %v472
      %v555 = vpack.c.b16 %v475, %v473
      %v556 = vpack.c.b16 %v478, %v476
      %v557 = vpack.c.b16 %v479, %v477
      %v558 = vpack.c.b16 %v482, %v480
      %v559 = vpack.c.b16 %v483, %v481
      %v560 = vpack.c.b16 %v486, %v484
      %v561 = vpack.c.b16 %v487, %v485
      %v562 = vpack.c.b16 %v490, %v488
      %v563 = vpack.c.b16 %v491, %v489
      %v564 = vpack.c.b16 %v494, %v492
      %v565 = vpack.c.b16 %v495, %v493
      %v566 = vpack.c.b16 %v498, %v496
      %v567 = vpack.c.b16 %v499, %v497
      %v568 = vpack.c.b16 %v502, %v500
      %v569 = vpack.c.b16 %v503, %v501
      %v570 = vpack.c.b16 %v506, %v504
      %v571 = vpack.c.b16 %v507, %v505
      %v623 = vunpack.c.l.b16 %v293
      %v624 = vunpack.c.l.b16 %v294
      %v625 = vunpack.c.l.b16 %v295
      %v626 = vunpack.c.l.b16 %v296
      %v627 = vunpack.c.l.b16 %v297
      %v628 = vunpack.c.l.b16 %v298
      %v629 = vunpack.c.l.b16 %v299
      %v630 = vunpack.c.l.b16 %v300
      %v631 = vunpack.c.l.b16 %v301
      %v632 = vunpack.c.l.b16 %v302
      %v633 = vunpack.c.l.b16 %v303
      %v634 = vunpack.c.l.b16 %v304
      %v635 = vunpack.c.l.b16 %v305
      %v636 = vunpack.c.l.b16 %v306
      %v637 = vunpack.c.l.b16 %v307
      %v638 = vunpack.c.l.b16 %v308
      %v639 = vunpack.c.l.b16 %v309
      %v640 = vunpack.c.l.b16 %v310
      %v641 = vunpack.c.l.b16 %v311
      %v642 = vpack.c.b16 %v624, %v623
      %v643 = vpack.c.b16 %v626, %v625
      %v644 = vpack.c.b16 %v628, %v627
      %v645 = vpack.c.b16 %v630, %v629
      %v646 = vpack.c.b16 %v632, %v631
      %v647 = vpack.c.b16 %v634, %v633
      %v648 = vpack.c.b16 %v636, %v635
      %v649 = vpack.c.b16 %v638, %v637
      %v650 = vpack.c.b16 %v640, %v639
      %v651 = vpack.c.b16 %v641, %v641
      %vm661 = vcmask 154624
      %v663 = vsel %vm661, %v509, 0
      %v666 = vsel %vm661, %v511, 0
      %v669 = vsel %vm661, %v513, 0
      %v672 = vsel %vm661, %v515, 0
      %v675 = vsel %vm661, %v517, 0
      %v678 = vsel %vm661, %v519, 0
      %v681 = vsel %vm661, %v521, 0
      %v684 = vsel %vm661, %v523, 0
      %v687 = vsel %vm661, %v525, 0
      %v690 = vsel %vm661, %v527, 0
      %v693 = vsel %vm661, %v529, 0
      %v696 = vsel %vm661, %v531, 0
      %v699 = vsel %vm661, %v533, 0
      %v702 = vsel %vm661, %v535, 0
      %v705 = vsel %vm661, %v537, 0
      %v708 = vsel %vm661, %v539, 0
      %v711 = vsel %vm661, %v541, 0
      %v714 = vsel %vm661, %v543, 0
      %v717 = vsel %vm661, %v545, 0
      %v720 = vsel %vm661, %v547, 0
      %v723 = vsel %vm661, %v549, 0
      %v726 = vsel %vm661, %v551, 0
      %v729 = vsel %vm661, %v553, 0
      %v732 = vsel %vm661, %v555, 0
      %v735 = vsel %vm661, %v557, 0
      %v738 = vsel %vm661, %v559, 0
      %v741 = vsel %vm661, %v561, 0
      %v744 = vsel %vm661, %v563, 0
      %v747 = vsel %vm661, %v565, 0
      %v750 = vsel %vm661, %v567, 0
      %v753 = vsel %vm661, %v569, 0
      %v756 = vsel %vm661, %v571, 0
      %vm758 = vcmask 1040384
      %vm759 = vcmask 1041408
      %v760 = vsel %vm758, 4294967295, 65535
      %v761 = vsel %vm759, %v760, 0
      %v763 = vand.u32 %v651, %v761
      %765 = vmatpush.bf16.msra.mxu0 %v649
      %766 = vmatpush.bf16.msra.mxu0 %v648
      %767 = vmatpush.bf16.msra.mxu0 %v647
      %768 = vmatpush.bf16.msra.mxu0 %v646
      %769 = vmatpush.bf16.msra.mxu0 %v645
      %770 = vmatpush.bf16.msra.mxu0 %v644
      %771 = vmatpush.bf16.msra.mxu0 %v643
      %772 = vmatpush.bf16.msra.mxu0 %v642
      %773 = vmatmul.bf16.gmra.mxu0 %v508
      %v774 = vpop.f32.mrf.mxu0
      %v775 = vadd.f32 %v314, %v774
      %v776 = vpop.f32.mrf.mxu0
      %v777 = vadd.f32 %v314, %v776
      %778 = vmatmul.bf16.gmra.mxu0 %v510
      %v779 = vpop.f32.mrf.mxu0
      %v780 = vadd.f32 %v314, %v779
      %v781 = vpop.f32.mrf.mxu0
      %v782 = vadd.f32 %v314, %v781
      %783 = vmatmul.bf16.gmra.mxu0 %v512
      %v784 = vpop.f32.mrf.mxu0
      %v785 = vadd.f32 %v314, %v784
      %v786 = vpop.f32.mrf.mxu0
      %v787 = vadd.f32 %v314, %v786
      %788 = vmatmul.bf16.gmra.mxu0 %v514
      %v789 = vpop.f32.mrf.mxu0
      %v790 = vadd.f32 %v314, %v789
      %v791 = vpop.f32.mrf.mxu0
      %v792 = vadd.f32 %v314, %v791
      %793 = vmatmul.bf16.gmra.mxu0 %v516
      %v794 = vpop.f32.mrf.mxu0
      %v795 = vadd.f32 %v314, %v794
      %v796 = vpop.f32.mrf.mxu0
      %v797 = vadd.f32 %v314, %v796
      %798 = vmatmul.bf16.gmra.mxu0 %v518
      %v799 = vpop.f32.mrf.mxu0
      %v800 = vadd.f32 %v314, %v799
      %v801 = vpop.f32.mrf.mxu0
      %v802 = vadd.f32 %v314, %v801
      %803 = vmatmul.bf16.gmra.mxu0 %v520
      %v804 = vpop.f32.mrf.mxu0
      %v805 = vadd.f32 %v314, %v804
      %v806 = vpop.f32.mrf.mxu0
      %v807 = vadd.f32 %v314, %v806
      %808 = vmatmul.bf16.gmra.mxu0 %v522
      %v809 = vpop.f32.mrf.mxu0
      %v810 = vadd.f32 %v314, %v809
      %v811 = vpop.f32.mrf.mxu0
      %v812 = vadd.f32 %v314, %v811
      %813 = vmatmul.bf16.gmra.mxu0 %v524
      %v814 = vpop.f32.mrf.mxu0
      %v815 = vadd.f32 %v314, %v814
      %v816 = vpop.f32.mrf.mxu0
      %v817 = vadd.f32 %v314, %v816
      %818 = vmatmul.bf16.gmra.mxu0 %v526
      %v819 = vpop.f32.mrf.mxu0
      %v820 = vadd.f32 %v314, %v819
      %v821 = vpop.f32.mrf.mxu0
      %v822 = vadd.f32 %v314, %v821
      %823 = vmatmul.bf16.gmra.mxu0 %v528
      %v824 = vpop.f32.mrf.mxu0
      %v825 = vadd.f32 %v314, %v824
      %v826 = vpop.f32.mrf.mxu0
      %v827 = vadd.f32 %v314, %v826
      %828 = vmatmul.bf16.gmra.mxu0 %v530
      %v829 = vpop.f32.mrf.mxu0
      %v830 = vadd.f32 %v314, %v829
      %v831 = vpop.f32.mrf.mxu0
      %v832 = vadd.f32 %v314, %v831
      %833 = vmatmul.bf16.gmra.mxu0 %v532
      %v834 = vpop.f32.mrf.mxu0
      %v835 = vadd.f32 %v314, %v834
      %v836 = vpop.f32.mrf.mxu0
      %v837 = vadd.f32 %v314, %v836
      %838 = vmatmul.bf16.gmra.mxu0 %v534
      %v839 = vpop.f32.mrf.mxu0
      %v840 = vadd.f32 %v314, %v839
      %v841 = vpop.f32.mrf.mxu0
      %v842 = vadd.f32 %v314, %v841
      %843 = vmatmul.bf16.gmra.mxu0 %v536
      %v844 = vpop.f32.mrf.mxu0
      %v845 = vadd.f32 %v314, %v844
      %v846 = vpop.f32.mrf.mxu0
      %v847 = vadd.f32 %v314, %v846
      %848 = vmatmul.bf16.gmra.mxu0 %v538
      %v849 = vpop.f32.mrf.mxu0
      %v850 = vadd.f32 %v314, %v849
      %v851 = vpop.f32.mrf.mxu0
      %v852 = vadd.f32 %v314, %v851
      %853 = vmatmul.bf16.gmra.mxu0 %v540
      %v854 = vpop.f32.mrf.mxu0
      %v855 = vadd.f32 %v314, %v854
      %v856 = vpop.f32.mrf.mxu0
      %v857 = vadd.f32 %v314, %v856
      %858 = vmatmul.bf16.gmra.mxu0 %v542
      %v859 = vpop.f32.mrf.mxu0
      %v860 = vadd.f32 %v314, %v859
      %v861 = vpop.f32.mrf.mxu0
      %v862 = vadd.f32 %v314, %v861
      %863 = vmatmul.bf16.gmra.mxu0 %v544
      %v864 = vpop.f32.mrf.mxu0
      %v865 = vadd.f32 %v314, %v864
      %v866 = vpop.f32.mrf.mxu0
      %v867 = vadd.f32 %v314, %v866
      %868 = vmatmul.bf16.gmra.mxu0 %v546
      %v869 = vpop.f32.mrf.mxu0
      %v870 = vadd.f32 %v314, %v869
      %v871 = vpop.f32.mrf.mxu0
      %v872 = vadd.f32 %v314, %v871
      %873 = vmatmul.bf16.gmra.mxu0 %v548
      %v874 = vpop.f32.mrf.mxu0
      %v875 = vadd.f32 %v314, %v874
      %v876 = vpop.f32.mrf.mxu0
      %v877 = vadd.f32 %v314, %v876
      %878 = vmatmul.bf16.gmra.mxu0 %v550
      %v879 = vpop.f32.mrf.mxu0
      %v880 = vadd.f32 %v314, %v879
      %v881 = vpop.f32.mrf.mxu0
      %v882 = vadd.f32 %v314, %v881
      %883 = vmatmul.bf16.gmra.mxu0 %v552
      %v884 = vpop.f32.mrf.mxu0
      %v885 = vadd.f32 %v314, %v884
      %v886 = vpop.f32.mrf.mxu0
      %v887 = vadd.f32 %v314, %v886
      %888 = vmatmul.bf16.gmra.mxu0 %v554
      %v889 = vpop.f32.mrf.mxu0
      %v890 = vadd.f32 %v314, %v889
      %v891 = vpop.f32.mrf.mxu0
      %v892 = vadd.f32 %v314, %v891
      %893 = vmatmul.bf16.gmra.mxu0 %v556
      %v894 = vpop.f32.mrf.mxu0
      %v895 = vadd.f32 %v314, %v894
      %v896 = vpop.f32.mrf.mxu0
      %v897 = vadd.f32 %v314, %v896
      %898 = vmatmul.bf16.gmra.mxu0 %v558
      %v899 = vpop.f32.mrf.mxu0
      %v900 = vadd.f32 %v314, %v899
      %v901 = vpop.f32.mrf.mxu0
      %v902 = vadd.f32 %v314, %v901
      %903 = vmatmul.bf16.gmra.mxu0 %v560
      %v904 = vpop.f32.mrf.mxu0
      %v905 = vadd.f32 %v314, %v904
      %v906 = vpop.f32.mrf.mxu0
      %v907 = vadd.f32 %v314, %v906
      %908 = vmatmul.bf16.gmra.mxu0 %v562
      %v909 = vpop.f32.mrf.mxu0
      %v910 = vadd.f32 %v314, %v909
      %v911 = vpop.f32.mrf.mxu0
      %v912 = vadd.f32 %v314, %v911
      %913 = vmatmul.bf16.gmra.mxu0 %v564
      %v914 = vpop.f32.mrf.mxu0
      %v915 = vadd.f32 %v314, %v914
      %v916 = vpop.f32.mrf.mxu0
      %v917 = vadd.f32 %v314, %v916
      %918 = vmatmul.bf16.gmra.mxu0 %v566
      %v919 = vpop.f32.mrf.mxu0
      %v920 = vadd.f32 %v314, %v919
      %v921 = vpop.f32.mrf.mxu0
      %v922 = vadd.f32 %v314, %v921
      %923 = vmatmul.bf16.gmra.mxu0 %v568
      %v924 = vpop.f32.mrf.mxu0
      %v925 = vadd.f32 %v314, %v924
      %v926 = vpop.f32.mrf.mxu0
      %v927 = vadd.f32 %v314, %v926
      %928 = vmatmul.bf16.gmra.mxu0 %v570
      %v929 = vpop.f32.mrf.mxu0
      %v930 = vadd.f32 %v314, %v929
      %v931 = vpop.f32.mrf.mxu0
      %v932 = vadd.f32 %v314, %v931
      %933 = vdwg.mxu0
      %934 = vmatpush.bf16.msra.mxu0 0
      %935 = vmatpush.bf16.msra.mxu0 0
      %936 = vmatpush.bf16.msra.mxu0 0
      %937 = vmatpush.bf16.msra.mxu0 0
      %938 = vmatpush.bf16.msra.mxu0 0
      %939 = vmatpush.bf16.msra.mxu0 0
      %940 = vmatpush.bf16.msra.mxu0 %v763
      %941 = vmatpush.bf16.msra.mxu0 %v650
      %942 = vmatmul.bf16.gmra.mxu0 %v663
      %v943 = vpop.f32.mrf.mxu0
      %v944 = vadd.f32 %v775, %v943
      %v945 = vpop.f32.mrf.mxu0
      %v946 = vadd.f32 %v777, %v945
      %947 = vmatmul.bf16.gmra.mxu0 %v666
      %v948 = vpop.f32.mrf.mxu0
      %v949 = vadd.f32 %v780, %v948
      %v950 = vpop.f32.mrf.mxu0
      %v951 = vadd.f32 %v782, %v950
      %952 = vmatmul.bf16.gmra.mxu0 %v669
      %v953 = vpop.f32.mrf.mxu0
      %v954 = vadd.f32 %v785, %v953
      %v955 = vpop.f32.mrf.mxu0
      %v956 = vadd.f32 %v787, %v955
      %957 = vmatmul.bf16.gmra.mxu0 %v672
      %v958 = vpop.f32.mrf.mxu0
      %v959 = vadd.f32 %v790, %v958
      %v960 = vpop.f32.mrf.mxu0
      %v961 = vadd.f32 %v792, %v960
      %962 = vmatmul.bf16.gmra.mxu0 %v675
      %v963 = vpop.f32.mrf.mxu0
      %v964 = vadd.f32 %v795, %v963
      %v965 = vpop.f32.mrf.mxu0
      %v966 = vadd.f32 %v797, %v965
      %967 = vmatmul.bf16.gmra.mxu0 %v678
      %v968 = vpop.f32.mrf.mxu0
      %v969 = vadd.f32 %v800, %v968
      %v970 = vpop.f32.mrf.mxu0
      %v971 = vadd.f32 %v802, %v970
      %972 = vmatmul.bf16.gmra.mxu0 %v681
      %v973 = vpop.f32.mrf.mxu0
      %v974 = vadd.f32 %v805, %v973
      %v975 = vpop.f32.mrf.mxu0
      %v976 = vadd.f32 %v807, %v975
      %977 = vmatmul.bf16.gmra.mxu0 %v684
      %v978 = vpop.f32.mrf.mxu0
      %v979 = vadd.f32 %v810, %v978
      %v980 = vpop.f32.mrf.mxu0
      %v981 = vadd.f32 %v812, %v980
      %982 = vmatmul.bf16.gmra.mxu0 %v687
      %v983 = vpop.f32.mrf.mxu0
      %v984 = vadd.f32 %v815, %v983
      %v985 = vpop.f32.mrf.mxu0
      %v986 = vadd.f32 %v817, %v985
      %987 = vmatmul.bf16.gmra.mxu0 %v690
      %v988 = vpop.f32.mrf.mxu0
      %v989 = vadd.f32 %v820, %v988
      %v990 = vpop.f32.mrf.mxu0
      %v991 = vadd.f32 %v822, %v990
      %992 = vmatmul.bf16.gmra.mxu0 %v693
      %v993 = vpop.f32.mrf.mxu0
      %v994 = vadd.f32 %v825, %v993
      %v995 = vpop.f32.mrf.mxu0
      %v996 = vadd.f32 %v827, %v995
      %997 = vmatmul.bf16.gmra.mxu0 %v696
      %v998 = vpop.f32.mrf.mxu0
      %v999 = vadd.f32 %v830, %v998
      %v1000 = vpop.f32.mrf.mxu0
      %v1001 = vadd.f32 %v832, %v1000
      %1002 = vmatmul.bf16.gmra.mxu0 %v699
      %v1003 = vpop.f32.mrf.mxu0
      %v1004 = vadd.f32 %v835, %v1003
      %v1005 = vpop.f32.mrf.mxu0
      %v1006 = vadd.f32 %v837, %v1005
      %1007 = vmatmul.bf16.gmra.mxu0 %v702
      %v1008 = vpop.f32.mrf.mxu0
      %v1009 = vadd.f32 %v840, %v1008
      %v1010 = vpop.f32.mrf.mxu0
      %v1011 = vadd.f32 %v842, %v1010
      %1012 = vmatmul.bf16.gmra.mxu0 %v705
      %v1013 = vpop.f32.mrf.mxu0
      %v1014 = vadd.f32 %v845, %v1013
      %v1015 = vpop.f32.mrf.mxu0
      %v1016 = vadd.f32 %v847, %v1015
      %1017 = vmatmul.bf16.gmra.mxu0 %v708
      %v1018 = vpop.f32.mrf.mxu0
      %v1019 = vadd.f32 %v850, %v1018
      %v1020 = vpop.f32.mrf.mxu0
      %v1021 = vadd.f32 %v852, %v1020
      %1022 = vmatmul.bf16.gmra.mxu0 %v711
      %v1023 = vpop.f32.mrf.mxu0
      %v1024 = vadd.f32 %v855, %v1023
      %v1025 = vpop.f32.mrf.mxu0
      %v1026 = vadd.f32 %v857, %v1025
      %1027 = vmatmul.bf16.gmra.mxu0 %v714
      %v1028 = vpop.f32.mrf.mxu0
      %v1029 = vadd.f32 %v860, %v1028
      %v1030 = vpop.f32.mrf.mxu0
      %v1031 = vadd.f32 %v862, %v1030
      %1032 = vmatmul.bf16.gmra.mxu0 %v717
      %v1033 = vpop.f32.mrf.mxu0
      %v1034 = vadd.f32 %v865, %v1033
      %v1035 = vpop.f32.mrf.mxu0
      %v1036 = vadd.f32 %v867, %v1035
      %1037 = vmatmul.bf16.gmra.mxu0 %v720
      %v1038 = vpop.f32.mrf.mxu0
      %v1039 = vadd.f32 %v870, %v1038
      %v1040 = vpop.f32.mrf.mxu0
      %v1041 = vadd.f32 %v872, %v1040
      %1042 = vmatmul.bf16.gmra.mxu0 %v723
      %v1043 = vpop.f32.mrf.mxu0
      %v1044 = vadd.f32 %v875, %v1043
      %v1045 = vpop.f32.mrf.mxu0
      %v1046 = vadd.f32 %v877, %v1045
      %1047 = vmatmul.bf16.gmra.mxu0 %v726
      %v1048 = vpop.f32.mrf.mxu0
      %v1049 = vadd.f32 %v880, %v1048
      %v1050 = vpop.f32.mrf.mxu0
      %v1051 = vadd.f32 %v882, %v1050
      %1052 = vmatmul.bf16.gmra.mxu0 %v729
      %v1053 = vpop.f32.mrf.mxu0
      %v1054 = vadd.f32 %v885, %v1053
      %v1055 = vpop.f32.mrf.mxu0
      %v1056 = vadd.f32 %v887, %v1055
      %1057 = vmatmul.bf16.gmra.mxu0 %v732
      %v1058 = vpop.f32.mrf.mxu0
      %v1059 = vadd.f32 %v890, %v1058
      %v1060 = vpop.f32.mrf.mxu0
      %v1061 = vadd.f32 %v892, %v1060
      %1062 = vmatmul.bf16.gmra.mxu0 %v735
      %v1063 = vpop.f32.mrf.mxu0
      %v1064 = vadd.f32 %v895, %v1063
      %v1065 = vpop.f32.mrf.mxu0
      %v1066 = vadd.f32 %v897, %v1065
      %1067 = vmatmul.bf16.gmra.mxu0 %v738
      %v1068 = vpop.f32.mrf.mxu0
      %v1069 = vadd.f32 %v900, %v1068
      %v1070 = vpop.f32.mrf.mxu0
      %v1071 = vadd.f32 %v902, %v1070
      %1072 = vmatmul.bf16.gmra.mxu0 %v741
      %v1073 = vpop.f32.mrf.mxu0
      %v1074 = vadd.f32 %v905, %v1073
      %v1075 = vpop.f32.mrf.mxu0
      %v1076 = vadd.f32 %v907, %v1075
      %1077 = vmatmul.bf16.gmra.mxu0 %v744
      %v1078 = vpop.f32.mrf.mxu0
      %v1079 = vadd.f32 %v910, %v1078
      %v1080 = vpop.f32.mrf.mxu0
      %v1081 = vadd.f32 %v912, %v1080
      %1082 = vmatmul.bf16.gmra.mxu0 %v747
      %v1083 = vpop.f32.mrf.mxu0
      %v1084 = vadd.f32 %v915, %v1083
      %v1085 = vpop.f32.mrf.mxu0
      %v1086 = vadd.f32 %v917, %v1085
      %1087 = vmatmul.bf16.gmra.mxu0 %v750
      %v1088 = vpop.f32.mrf.mxu0
      %v1089 = vadd.f32 %v920, %v1088
      %v1090 = vpop.f32.mrf.mxu0
      %v1091 = vadd.f32 %v922, %v1090
      %1092 = vmatmul.bf16.gmra.mxu0 %v753
      %v1093 = vpop.f32.mrf.mxu0
      %v1094 = vadd.f32 %v925, %v1093
      %v1095 = vpop.f32.mrf.mxu0
      %v1096 = vadd.f32 %v927, %v1095
      %1097 = vmatmul.bf16.gmra.mxu0 %v756
      %v1098 = vpop.f32.mrf.mxu0
      %v1099 = vadd.f32 %v930, %v1098
      %v1100 = vpop.f32.mrf.mxu0
      %v1101 = vadd.f32 %v932, %v1100
      %1102 = vdwg.mxu0
      %v1103 = vmax.f32 %v944, 0.0
      %v1104 = vmax.f32 %v946, 0.0
      %v1105 = vmax.f32 %v949, 0.0
      %v1106 = vmax.f32 %v951, 0.0
      %v1107 = vmax.f32 %v954, 0.0
      %v1108 = vmax.f32 %v956, 0.0
      %v1109 = vmax.f32 %v959, 0.0
      %v1110 = vmax.f32 %v961, 0.0
      %v1111 = vmax.f32 %v964, 0.0
      %v1112 = vmax.f32 %v966, 0.0
      %v1113 = vmax.f32 %v969, 0.0
      %v1114 = vmax.f32 %v971, 0.0
      %v1115 = vmax.f32 %v974, 0.0
      %v1116 = vmax.f32 %v976, 0.0
      %v1117 = vmax.f32 %v979, 0.0
      %v1118 = vmax.f32 %v981, 0.0
      %v1119 = vmax.f32 %v984, 0.0
      %v1120 = vmax.f32 %v986, 0.0
      %v1121 = vmax.f32 %v989, 0.0
      %v1122 = vmax.f32 %v991, 0.0
      %v1123 = vmax.f32 %v994, 0.0
      %v1124 = vmax.f32 %v996, 0.0
      %v1125 = vmax.f32 %v999, 0.0
      %v1126 = vmax.f32 %v1001, 0.0
      %v1127 = vmax.f32 %v1004, 0.0
      %v1128 = vmax.f32 %v1006, 0.0
      %v1129 = vmax.f32 %v1009, 0.0
      %v1130 = vmax.f32 %v1011, 0.0
      %v1131 = vmax.f32 %v1014, 0.0
      %v1132 = vmax.f32 %v1016, 0.0
      %v1133 = vmax.f32 %v1019, 0.0
      %v1134 = vmax.f32 %v1021, 0.0
      %v1135 = vmax.f32 %v1024, 0.0
      %v1136 = vmax.f32 %v1026, 0.0
      %v1137 = vmax.f32 %v1029, 0.0
      %v1138 = vmax.f32 %v1031, 0.0
      %v1139 = vmax.f32 %v1034, 0.0
      %v1140 = vmax.f32 %v1036, 0.0
      %v1141 = vmax.f32 %v1039, 0.0
      %v1142 = vmax.f32 %v1041, 0.0
      %v1143 = vmax.f32 %v1044, 0.0
      %v1144 = vmax.f32 %v1046, 0.0
      %v1145 = vmax.f32 %v1049, 0.0
      %v1146 = vmax.f32 %v1051, 0.0
      %v1147 = vmax.f32 %v1054, 0.0
      %v1148 = vmax.f32 %v1056, 0.0
      %v1149 = vmax.f32 %v1059, 0.0
      %v1150 = vmax.f32 %v1061, 0.0
      %v1151 = vmax.f32 %v1064, 0.0
      %v1152 = vmax.f32 %v1066, 0.0
      %v1153 = vmax.f32 %v1069, 0.0
      %v1154 = vmax.f32 %v1071, 0.0
      %v1155 = vmax.f32 %v1074, 0.0
      %v1156 = vmax.f32 %v1076, 0.0
      %v1157 = vmax.f32 %v1079, 0.0
      %v1158 = vmax.f32 %v1081, 0.0
      %v1159 = vmax.f32 %v1084, 0.0
      %v1160 = vmax.f32 %v1086, 0.0
      %v1161 = vmax.f32 %v1089, 0.0
      %v1162 = vmax.f32 %v1091, 0.0
      %v1163 = vmax.f32 %v1094, 0.0
      %v1164 = vmax.f32 %v1096, 0.0
      %v1165 = vmax.f32 %v1099, 0.0
      %v1166 = vmax.f32 %v1101, 0.0
      %v1167 = vpack.c.bf16 %v1103, %v1103
      %v1168 = vpack.c.bf16 %v1104, %v1104
      %v1169 = vpack.c.bf16 %v1105, %v1105
      %v1170 = vpack.c.bf16 %v1106, %v1106
      %v1171 = vpack.c.bf16 %v1107, %v1107
      %v1172 = vpack.c.bf16 %v1108, %v1108
      %v1173 = vpack.c.bf16 %v1109, %v1109
      %v1174 = vpack.c.bf16 %v1110, %v1110
      %v1175 = vpack.c.bf16 %v1111, %v1111
      %v1176 = vpack.c.bf16 %v1112, %v1112
      %v1177 = vpack.c.bf16 %v1113, %v1113
      %v1178 = vpack.c.bf16 %v1114, %v1114
      %v1179 = vpack.c.bf16 %v1115, %v1115
      %v1180 = vpack.c.bf16 %v1116, %v1116
      %v1181 = vpack.c.bf16 %v1117, %v1117
      %v1182 = vpack.c.bf16 %v1118, %v1118
      %v1183 = vpack.c.bf16 %v1119, %v1119
      %v1184 = vpack.c.bf16 %v1120, %v1120
      %v1185 = vpack.c.bf16 %v1121, %v1121
      %v1186 = vpack.c.bf16 %v1122, %v1122
      %v1187 = vpack.c.bf16 %v1123, %v1123
      %v1188 = vpack.c.bf16 %v1124, %v1124
      %v1189 = vpack.c.bf16 %v1125, %v1125
      %v1190 = vpack.c.bf16 %v1126, %v1126
      %v1191 = vpack.c.bf16 %v1127, %v1127
      %v1192 = vpack.c.bf16 %v1128, %v1128
      %v1193 = vpack.c.bf16 %v1129, %v1129
      %v1194 = vpack.c.bf16 %v1130, %v1130
      %v1195 = vpack.c.bf16 %v1131, %v1131
      %v1196 = vpack.c.bf16 %v1132, %v1132
      %v1197 = vpack.c.bf16 %v1133, %v1133
      %v1198 = vpack.c.bf16 %v1134, %v1134
      %v1199 = vpack.c.bf16 %v1135, %v1135
      %v1200 = vpack.c.bf16 %v1136, %v1136
      %v1201 = vpack.c.bf16 %v1137, %v1137
      %v1202 = vpack.c.bf16 %v1138, %v1138
      %v1203 = vpack.c.bf16 %v1139, %v1139
      %v1204 = vpack.c.bf16 %v1140, %v1140
      %v1205 = vpack.c.bf16 %v1141, %v1141
      %v1206 = vpack.c.bf16 %v1142, %v1142
      %v1207 = vpack.c.bf16 %v1143, %v1143
      %v1208 = vpack.c.bf16 %v1144, %v1144
      %v1209 = vpack.c.bf16 %v1145, %v1145
      %v1210 = vpack.c.bf16 %v1146, %v1146
      %v1211 = vpack.c.bf16 %v1147, %v1147
      %v1212 = vpack.c.bf16 %v1148, %v1148
      %v1213 = vpack.c.bf16 %v1149, %v1149
      %v1214 = vpack.c.bf16 %v1150, %v1150
      %v1215 = vpack.c.bf16 %v1151, %v1151
      %v1216 = vpack.c.bf16 %v1152, %v1152
      %v1217 = vpack.c.bf16 %v1153, %v1153
      %v1218 = vpack.c.bf16 %v1154, %v1154
      %v1219 = vpack.c.bf16 %v1155, %v1155
      %v1220 = vpack.c.bf16 %v1156, %v1156
      %v1221 = vpack.c.bf16 %v1157, %v1157
      %v1222 = vpack.c.bf16 %v1158, %v1158
      %v1223 = vpack.c.bf16 %v1159, %v1159
      %v1224 = vpack.c.bf16 %v1160, %v1160
      %v1225 = vpack.c.bf16 %v1161, %v1161
      %v1226 = vpack.c.bf16 %v1162, %v1162
      %v1227 = vpack.c.bf16 %v1163, %v1163
      %v1228 = vpack.c.bf16 %v1164, %v1164
      %v1229 = vpack.c.bf16 %v1165, %v1165
      %v1230 = vpack.c.bf16 %v1166, %v1166
      %vm1231 = vcmask 519168
      %1232 = vst.msk [vmem:[%s226] sm:$0xf] %vm1231, %v1167
      %1233 = vst.msk [vmem:[%s226 + $0x4] sm:$0xf] %vm1231, %v1168
      %1234 = vst.msk [vmem:[%s226 + $0x8] sm:$0xf] %vm1231, %v1169
      %1235 = vst.msk [vmem:[%s226 + $0xc] sm:$0xf] %vm1231, %v1170
      %1236 = vst.msk [vmem:[%s226 + $0x10] sm:$0xf] %vm1231, %v1171
      %1237 = vst.msk [vmem:[%s226 + $0x14] sm:$0xf] %vm1231, %v1172
      %1238 = vst.msk [vmem:[%s226 + $0x18] sm:$0xf] %vm1231, %v1173
      %1239 = vst.msk [vmem:[%s226 + $0x1c] sm:$0xf] %vm1231, %v1174
      %1240 = vst.msk [vmem:[%s226 + $0x20] sm:$0xf] %vm1231, %v1175
      %1241 = vst.msk [vmem:[%s226 + $0x24] sm:$0xf] %vm1231, %v1176
      %1242 = vst.msk [vmem:[%s226 + $0x28] sm:$0xf] %vm1231, %v1177
      %1243 = vst.msk [vmem:[%s226 + $0x2c] sm:$0xf] %vm1231, %v1178
      %1244 = vst.msk [vmem:[%s226 + $0x30] sm:$0xf] %vm1231, %v1179
      %1245 = vst.msk [vmem:[%s226 + $0x34] sm:$0xf] %vm1231, %v1180
      %1246 = vst.msk [vmem:[%s226 + $0x38] sm:$0xf] %vm1231, %v1181
      %1247 = vst.msk [vmem:[%s226 + $0x3c] sm:$0xf] %vm1231, %v1182
      %1248 = vst.msk [vmem:[%s226 + $0x40] sm:$0xf] %vm1231, %v1183
      %1249 = vst.msk [vmem:[%s226 + $0x44] sm:$0xf] %vm1231, %v1184
      %1250 = vst.msk [vmem:[%s226 + $0x48] sm:$0xf] %vm1231, %v1185
      %1251 = vst.msk [vmem:[%s226 + $0x4c] sm:$0xf] %vm1231, %v1186
      %1252 = vst.msk [vmem:[%s226 + $0x50] sm:$0xf] %vm1231, %v1187
      %1253 = vst.msk [vmem:[%s226 + $0x54] sm:$0xf] %vm1231, %v1188
      %1254 = vst.msk [vmem:[%s226 + $0x58] sm:$0xf] %vm1231, %v1189
      %1255 = vst.msk [vmem:[%s226 + $0x5c] sm:$0xf] %vm1231, %v1190
      %1256 = vst.msk [vmem:[%s226 + $0x60] sm:$0xf] %vm1231, %v1191
      %1257 = vst.msk [vmem:[%s226 + $0x64] sm:$0xf] %vm1231, %v1192
      %1258 = vst.msk [vmem:[%s226 + $0x68] sm:$0xf] %vm1231, %v1193
      %1259 = vst.msk [vmem:[%s226 + $0x6c] sm:$0xf] %vm1231, %v1194
      %1260 = vst.msk [vmem:[%s226 + $0x70] sm:$0xf] %vm1231, %v1195
      %1261 = vst.msk [vmem:[%s226 + $0x74] sm:$0xf] %vm1231, %v1196
      %1262 = vst.msk [vmem:[%s226 + $0x78] sm:$0xf] %vm1231, %v1197
      %1263 = vst.msk [vmem:[%s226 + $0x7c] sm:$0xf] %vm1231, %v1198
      %1264 = vst.msk [vmem:[%s226 + $0x80] sm:$0xf] %vm1231, %v1199
      %1265 = vst.msk [vmem:[%s226 + $0x84] sm:$0xf] %vm1231, %v1200
      %1266 = vst.msk [vmem:[%s226 + $0x88] sm:$0xf] %vm1231, %v1201
      %1267 = vst.msk [vmem:[%s226 + $0x8c] sm:$0xf] %vm1231, %v1202
      %1268 = vst.msk [vmem:[%s226 + $0x90] sm:$0xf] %vm1231, %v1203
      %1269 = vst.msk [vmem:[%s226 + $0x94] sm:$0xf] %vm1231, %v1204
      %1270 = vst.msk [vmem:[%s226 + $0x98] sm:$0xf] %vm1231, %v1205
      %1271 = vst.msk [vmem:[%s226 + $0x9c] sm:$0xf] %vm1231, %v1206
      %1272 = vst.msk [vmem:[%s226 + $0xa0] sm:$0xf] %vm1231, %v1207
      %1273 = vst.msk [vmem:[%s226 + $0xa4] sm:$0xf] %vm1231, %v1208
      %1274 = vst.msk [vmem:[%s226 + $0xa8] sm:$0xf] %vm1231, %v1209
      %1275 = vst.msk [vmem:[%s226 + $0xac] sm:$0xf] %vm1231, %v1210
      %1276 = vst.msk [vmem:[%s226 + $0xb0] sm:$0xf] %vm1231, %v1211
      %1277 = vst.msk [vmem:[%s226 + $0xb4] sm:$0xf] %vm1231, %v1212
      %1278 = vst.msk [vmem:[%s226 + $0xb8] sm:$0xf] %vm1231, %v1213
      %1279 = vst.msk [vmem:[%s226 + $0xbc] sm:$0xf] %vm1231, %v1214
      %1280 = vst.msk [vmem:[%s226 + $0xc0] sm:$0xf] %vm1231, %v1215
      %1281 = vst.msk [vmem:[%s226 + $0xc4] sm:$0xf] %vm1231, %v1216
      %1282 = vst.msk [vmem:[%s226 + $0xc8] sm:$0xf] %vm1231, %v1217
      %1283 = vst.msk [vmem:[%s226 + $0xcc] sm:$0xf] %vm1231, %v1218
      %1284 = vst.msk [vmem:[%s226 + $0xd0] sm:$0xf] %vm1231, %v1219
      %1285 = vst.msk [vmem:[%s226 + $0xd4] sm:$0xf] %vm1231, %v1220
      %1286 = vst.msk [vmem:[%s226 + $0xd8] sm:$0xf] %vm1231, %v1221
      %1287 = vst.msk [vmem:[%s226 + $0xdc] sm:$0xf] %vm1231, %v1222
      %1288 = vst.msk [vmem:[%s226 + $0xe0] sm:$0xf] %vm1231, %v1223
      %1289 = vst.msk [vmem:[%s226 + $0xe4] sm:$0xf] %vm1231, %v1224
      %1290 = vst.msk [vmem:[%s226 + $0xe8] sm:$0xf] %vm1231, %v1225
      %1291 = vst.msk [vmem:[%s226 + $0xec] sm:$0xf] %vm1231, %v1226
      %1292 = vst.msk [vmem:[%s226 + $0xf0] sm:$0xf] %vm1231, %v1227
      %1293 = vst.msk [vmem:[%s226 + $0xf4] sm:$0xf] %vm1231, %v1228
      %1294 = vst.msk [vmem:[%s226 + $0xf8] sm:$0xf] %vm1231, %v1229
      %1295 = vst.msk [vmem:[%s226 + $0xfc] sm:$0xf] %vm1231, %v1230
      %s1296 = smul.u32 64, %s18
      %p1297 = scmp.lt.s32.totalorder %s1296, 127
      %s1298 = scalar_select %p1297, %s1296, 127
      %p1299 = scmp.lt.s32.totalorder %s19, 0
      %s1300 = scalar_select %p1299, %s19, 0
      %s1301 = sadd.s32 %s1300, %s1298
      %s1302 = smul.addr %s1301, 4
      %s1303 = scalar_lea.vmem %s3, %s1302
      // Predicated region
      $region33: #{fused_matmul.1} parent=31 // pred_check
        %p1304 = pneg %p124
      $region34: #{fused_matmul.1} parent=31 // pred_check_branch
        %1306 = sbr.rel (%p1304) target = $region36
      $region35: #{fused_matmul.1} parent=31 // pred_region
        %s1307 = smul.u32 64, %s18
      $region36: #{fused_matmul.1} parent=31 // pred_fallthru
        _
    $region32: #{fused_matmul.1} parent=5 // pred_fallthru
      _
    %p1308 = scmp.le.s32.totalorder 2, %s9
    // Predicated region
    $region37: #{fused_matmul.1} parent=5 // pred_check
      %p1309 = pneg %p1308
    $region38: #{fused_matmul.1} parent=5 // pred_check_branch
      %1311 = sbr.rel (%p1309) target = $region40
    $region39: #{fused_matmul.1} parent=5 // pred_region
      %s1312 = ssub.s32 %s9, 2
      // Predicated region
      $region41: #{fused_matmul.1} parent=39 // pred_check
        %p1313 = pneg %p130
      $region42: #{fused_matmul.1} parent=39 // pred_check_branch
        %1315 = sbr.rel (%p1313) target = $region44
      $region43: #{fused_matmul.1} parent=39 // pred_region
        %s1316 = smul.u32 64, %s20
        %p1317 = scmp.lt.s32.totalorder %s1316, 127
        %s1318 = scalar_select %p1317, %s1316, 127
        %p1319 = scmp.lt.s32.totalorder %s21, 0
        %s1320 = scalar_select %p1319, %s21, 0
        %s1321 = sadd.s32 %s1320, %s1318
        %s1322 = smul.addr %s1321, 4
        %s1323 = scalar_lea.vmem %s3, %s1322
      $region44: #{fused_matmul.1} parent=39 // pred_fallthru
        _
    $region40: #{fused_matmul.1} parent=5 // pred_fallthru
      _
  $region6: #{fused_matmul.1} parent=0 // loop_footer
    %s13 = sadd.s32 1, %s9
  $region7: #{fused_matmul.1} parent=0 // loop_footer_branch
    %8 = sbr.rel target = $region3
  $region8: #{fused_matmul.1} parent=0 // loop_exit
    _

</llo_original>
